<compile_context>
chip_gen: v7x
topology: tpu7x:2x2x1
jax: 0.10.0
libtpu: 0.0.40
codegen_flags: <defaults>
</compile_context>

<pallas_src>
import functools

import jax
import jax.numpy as jnp
from jax.experimental import pallas as pl
from jax.experimental.pallas import tpu as pltpu


def _round_up(n, m):
    return (n + m - 1) // m * m


def _choose_row_tile(M, tm):
    """Row tile: multiple of 16, <= tm, and >=2 tiles for mid/large M (v7x)."""
    m16 = _round_up(M, 16)
    if m16 <= tm:
        if M >= 256:
            # Split so both v7x TensorCores get work; each half still >=128
            # rows, so the 0.35 us grid-step overhead stays negligible.
            return _round_up((M + 1) // 2, 16)
        return m16
    half = _round_up((M + 1) // 2, 16)
    return min(tm, half)


def _choose_h_chunk(H):
    """Largest chunk <=512 that divides H and is a multiple of 128."""
    for c in (512, 256, 128):
        if H % c == 0:
            return c
    return H


def _ffn_kernel(x_ref, w1_ref, b1_ref, w2_ref, b2_ref, o_ref, *, h_chunk):
    # x_ref : (tm, D) f32    w1_ref: (D, H) bf16    b1_ref: (1, H) f32
    # w2_ref: (H, D) bf16    b2_ref: (1, D) f32     o_ref : (tm, D) bf16
    x = x_ref[...].astype(jnp.bfloat16)          # f32 -> bf16 on the VPU
    tm, D = o_ref.shape
    H = w1_ref.shape[1]

    acc = jnp.zeros((tm, D), jnp.float32)
    # Statically unrolled loop over hidden-dim chunks: the live intermediate is
    # only (tm, h_chunk), so it stays near vreg scale instead of spilling a
    # full (tm, H) f32 buffer between the two matmuls.
    for h0 in range(0, H, h_chunk):
        h = jnp.dot(x, w1_ref[:, h0:h0 + h_chunk],
                    preferred_element_type=jnp.float32)
        h = jnp.maximum(h + b1_ref[:, h0:h0 + h_chunk], 0.0)     # bias+ReLU f32
        acc = acc + jnp.dot(h.astype(jnp.bfloat16),               # bf16 MXU pass
                            w2_ref[h0:h0 + h_chunk, :],
                            preferred_element_type=jnp.float32)

    # Dropout(p=0.2) in eval mode == identity.
    o_ref[...] = (acc + b2_ref[...]).astype(o_ref.dtype)


@functools.partial(jax.jit, static_argnames=("tm",))
def feed_forward(x, w1, b1, w2, b2, *, tm=512):
    """x: (B, T, n_embd) float32. w1/w2 bf16, b1/b2 f32. Returns bf16."""
    B, T, D = x.shape
    H = w1.shape[1]
    M = B * T

    tm_eff = _choose_row_tile(M, tm)
    h_chunk = _choose_h_chunk(H)
    num_tiles = pl.cdiv(M, tm_eff)

    x2d = x.reshape(M, D)                       # free reshape; cast is in-kernel
    b1_2d = b1.reshape(1, H).astype(jnp.float32)
    b2_2d = b2.reshape(1, D).astype(jnp.float32)

    cost = pl.CostEstimate(
        flops=4 * M * D * H,                    # two matmuls, 2*M*D*H each
        transcendentals=0,
        bytes_accessed=(M * D * 4               # f32 activations in
                        + 2 * D * H * 2         # bf16 weights
                        + (H + D) * 4           # f32 biases
                        + M * D * 2),           # bf16 output
    )

    # Footprint-derived scoped-VMEM limit (double-buffered tiles + weights).
    vmem_bytes = (2 * tm_eff * D * (4 + 2)      # x in (f32) + out (bf16)
                  + 2 * 2 * D * H * 2           # W1 + W2 bf16
                  + 2 * (H + D) * 4             # biases
                  + 4 * tm_eff * max(h_chunk, D) * 4)   # live f32 intermediates
    vmem_limit = max(32 << 20, min(64 << 20, 2 * vmem_bytes))

    out2d = pl.pallas_call(
        functools.partial(_ffn_kernel, h_chunk=h_chunk),
        out_shape=jax.ShapeDtypeStruct((M, D), jnp.bfloat16),
        grid_spec=pltpu.PrefetchScalarGridSpec(
            num_scalar_prefetch=0,
            grid=(num_tiles,),
            in_specs=[
                pl.BlockSpec((tm_eff, D), lambda i: (i, 0)),  # x row tile (f32)
                pl.BlockSpec((D, H), lambda i: (0, 0)),       # W1 (resident)
                pl.BlockSpec((1, H), lambda i: (0, 0)),       # b1
                pl.BlockSpec((H, D), lambda i: (0, 0)),       # W2 (resident)
                pl.BlockSpec((1, D), lambda i: (0, 0)),       # b2
            ],
            out_specs=pl.BlockSpec((tm_eff, D), lambda i: (i, 0)),
        ),
        compiler_params=pltpu.CompilerParams(
            dimension_semantics=("parallel",),    # shards row tiles on v7x
            vmem_limit_bytes=vmem_limit,
        ),
        cost_estimate=cost,
    )(x2d, w1, b1_2d, w2, b2_2d)

    return out2d.reshape(B, T, D)


def _reference(x, w1_bf, b1, w2_bf, b2):
    """Plain-JAX reference with the same bf16-in / f32-accumulate math."""
    B, T, D = x.shape
    xb = x.reshape(-1, D).astype(jnp.bfloat16)
    h = jnp.dot(xb, w1_bf, preferred_element_type=jnp.float32) + b1
    h = jnp.maximum(h, 0.0)
    y = jnp.dot(h.astype(jnp.bfloat16), w2_bf,
                preferred_element_type=jnp.float32) + b2
    return y.reshape(B, T, D)


def init_params(key, n_embd):
    """GPT-style init: N(0, 0.02) weights (stored bf16), small biases (f32).

    The PyTorch module zeroes Linear biases; small random biases are used here
    so the in-kernel bias path is actually exercised by the check.
    """
    hidden = 4 * n_embd
    k1, k2, k3, k4 = jax.random.split(key, 4)
    w1 = (0.02 * jax.random.normal(k1, (n_embd, hidden), jnp.float32)
          ).astype(jnp.bfloat16)
    w2 = (0.02 * jax.random.normal(k3, (hidden, n_embd), jnp.float32)
          ).astype(jnp.bfloat16)
    b1 = 0.02 * jax.random.normal(k2, (hidden,), jnp.float32)
    b2 = 0.02 * jax.random.normal(k4, (n_embd,), jnp.float32)
    return w1, b1, w2, b2


if __name__ == "__main__":
    n_embd = 256          # matches the module's global
    key = jax.random.PRNGKey(0)
    kx, kp, kx2 = jax.random.split(key, 3)
    w1, b1, w2, b2 = init_params(kp, n_embd)

    # 1) Toy shape: single row tile (tm clamped to the 16-row granule).
    B, T = 2, 8
    x = jax.random.normal(kx, (B, T, n_embd), jnp.float32)
    out = jax.block_until_ready(feed_forward(x, w1, b1, w2, b2))
    ref = _reference(x, w1, b1, w2, b2)
    assert out.shape == (B, T, n_embd)
    assert jnp.allclose(out.astype(jnp.float32), ref, atol=2.5e-2, rtol=2.5e-2), \
        "small-shape mismatch"

    # 2) Larger, non-divisible shape: M=400 -> two row tiles of 208 with a
    #    ragged (masked) last block and no wrapper-side padding/slicing.
    B2, T2 = 4, 100
    x2 = jax.random.normal(kx2, (B2, T2, n_embd), jnp.float32)
    out2 = jax.block_until_ready(feed_forward(x2, w1, b1, w2, b2))
    ref2 = _reference(x2, w1, b1, w2, b2)
    assert out2.shape == (B2, T2, n_embd)
    assert jnp.allclose(out2.astype(jnp.float32), ref2, atol=2.5e-2, rtol=2.5e-2), \
        "tiled-shape mismatch"

    print("KERNEL_OK")
</pallas_src>

<mosaic_0001>
module attributes {stable_mosaic.version = 11 : i64} {
  func.func @_ffn_kernel(%arg0: i32, %arg1: memref<16x256xf32, #tpu.memory_space<vmem>>, %arg2: memref<256x1024xbf16, #tpu.memory_space<vmem>>, %arg3: memref<1x1024xf32, #tpu.memory_space<vmem>>, %arg4: memref<1024x256xbf16, #tpu.memory_space<vmem>>, %arg5: memref<1x256xf32, #tpu.memory_space<vmem>>, %arg6: memref<16x256xbf16, #tpu.memory_space<vmem>>) attributes {dimension_semantics = [#tpu.dimension_semantics<parallel>], iteration_bounds = array<i64: 1>, scalar_prefetch = 0 : i64, scratch_operands = 0 : i64, tpu.core_type = #tpu.core_type<tc>, window_params = [{transform_indices = @transform_0, window_bounds = array<i64: 16, 256>}, {pipeline_mode = #tpu.pipeline_mode<synchronous>, transform_indices = @transform_1, window_bounds = array<i64: 256, 1024>}, {pipeline_mode = #tpu.pipeline_mode<synchronous>, transform_indices = @transform_2, window_bounds = array<i64: 1, 1024>}, {pipeline_mode = #tpu.pipeline_mode<synchronous>, transform_indices = @transform_3, window_bounds = array<i64: 1024, 256>}, {pipeline_mode = #tpu.pipeline_mode<synchronous>, transform_indices = @transform_4, window_bounds = array<i64: 1, 256>}, {transform_indices = @transform_5, window_bounds = array<i64: 16, 256>}]} {
    %c0 = arith.constant 0 : index
    %c0_0 = arith.constant 0 : index
    %0 = vector.load %arg1[%c0, %c0_0] : memref<16x256xf32, #tpu.memory_space<vmem>>, vector<16x256xf32>
    %1 = arith.truncf %0 : vector<16x256xf32> to vector<16x256xbf16>
    %cst = arith.constant 0.000000e+00 : f32
    %2 = vector.broadcast %cst : f32 to vector<16x256xf32>
    %c0_1 = arith.constant 0 : index
    %c0_2 = arith.constant 0 : index
    %3 = vector.load %arg2[%c0_1, %c0_2] : memref<256x1024xbf16, #tpu.memory_space<vmem>>, vector<256x512xbf16>
    %cst_3 = arith.constant dense<0.000000e+00> : vector<16x512xf32>
    %4 = tpu.matmul %1, %3, %cst_3 {dimension_numbers = #tpu.dot_dimension_numbers<[1], [0], [0], [1], [0, 0, 1, 1], [], []>} : vector<16x256xbf16>, vector<256x512xbf16>, vector<16x512xf32> -> vector<16x512xf32>
    %c0_4 = arith.constant 0 : index
    %c0_5 = arith.constant 0 : index
    %5 = vector.load %arg3[%c0_4, %c0_5] : memref<1x1024xf32, #tpu.memory_space<vmem>>, vector<1x512xf32>
    %6 = vector.broadcast %5 : vector<1x512xf32> to vector<16x512xf32>
    %7 = arith.addf %4, %6 : vector<16x512xf32>
    %cst_6 = arith.constant 0.000000e+00 : f32
    %8 = vector.broadcast %cst_6 : f32 to vector<16x512xf32>
    %9 = arith.maximumf %7, %8 : vector<16x512xf32>
    %10 = arith.truncf %9 : vector<16x512xf32> to vector<16x512xbf16>
    %c0_7 = arith.constant 0 : index
    %c0_8 = arith.constant 0 : index
    %11 = vector.load %arg4[%c0_7, %c0_8] : memref<1024x256xbf16, #tpu.memory_space<vmem>>, vector<512x256xbf16>
    %cst_9 = arith.constant dense<0.000000e+00> : vector<16x256xf32>
    %12 = tpu.matmul %10, %11, %cst_9 {dimension_numbers = #tpu.dot_dimension_numbers<[1], [0], [0], [1], [0, 0, 1, 1], [], []>} : vector<16x512xbf16>, vector<512x256xbf16>, vector<16x256xf32> -> vector<16x256xf32>
    %13 = arith.addf %2, %12 : vector<16x256xf32>
    %c0_10 = arith.constant 0 : index
    %c512 = arith.constant 512 : index
    %14 = vector.load %arg2[%c0_10, %c512] : memref<256x1024xbf16, #tpu.memory_space<vmem>>, vector<256x512xbf16>
    %cst_11 = arith.constant dense<0.000000e+00> : vector<16x512xf32>
    %15 = tpu.matmul %1, %14, %cst_11 {dimension_numbers = #tpu.dot_dimension_numbers<[1], [0], [0], [1], [0, 0, 1, 1], [], []>} : vector<16x256xbf16>, vector<256x512xbf16>, vector<16x512xf32> -> vector<16x512xf32>
    %c0_12 = arith.constant 0 : index
    %c512_13 = arith.constant 512 : index
    %16 = vector.load %arg3[%c0_12, %c512_13] : memref<1x1024xf32, #tpu.memory_space<vmem>>, vector<1x512xf32>
    %17 = vector.broadcast %16 : vector<1x512xf32> to vector<16x512xf32>
    %18 = arith.addf %15, %17 : vector<16x512xf32>
    %cst_14 = arith.constant 0.000000e+00 : f32
    %19 = vector.broadcast %cst_14 : f32 to vector<16x512xf32>
    %20 = arith.maximumf %18, %19 : vector<16x512xf32>
    %21 = arith.truncf %20 : vector<16x512xf32> to vector<16x512xbf16>
    %c512_15 = arith.constant 512 : index
    %c0_16 = arith.constant 0 : index
    %22 = vector.load %arg4[%c512_15, %c0_16] : memref<1024x256xbf16, #tpu.memory_space<vmem>>, vector<512x256xbf16>
    %cst_17 = arith.constant dense<0.000000e+00> : vector<16x256xf32>
    %23 = tpu.matmul %21, %22, %cst_17 {dimension_numbers = #tpu.dot_dimension_numbers<[1], [0], [0], [1], [0, 0, 1, 1], [], []>} : vector<16x512xbf16>, vector<512x256xbf16>, vector<16x256xf32> -> vector<16x256xf32>
    %24 = arith.addf %13, %23 : vector<16x256xf32>
    %c0_18 = arith.constant 0 : index
    %c0_19 = arith.constant 0 : index
    %25 = vector.load %arg5[%c0_18, %c0_19] : memref<1x256xf32, #tpu.memory_space<vmem>>, vector<1x256xf32>
    %26 = vector.broadcast %25 : vector<1x256xf32> to vector<16x256xf32>
    %27 = arith.addf %24, %26 : vector<16x256xf32>
    %28 = arith.truncf %27 : vector<16x256xf32> to vector<16x256xbf16>
    %c0_20 = arith.constant 0 : index
    %c0_21 = arith.constant 0 : index
    %29 = vector.load %arg6[%c0_20, %c0_21] : memref<16x256xbf16, #tpu.memory_space<vmem>>, vector<16x256xbf16>
    tpu.vector_store %arg6[%c0_20, %c0_21], %28 {strides = array<i32>} : memref<16x256xbf16, #tpu.memory_space<vmem>>, vector<16x256xbf16>,
    return
  }
  func.func @transform_0(%arg0: i32) -> (i32, i32) {
    %c0_i32 = arith.constant 0 : i32
    %c0_i32_0 = arith.constant 0 : i32
    return %arg0, %c0_i32 : i32, i32
  }
  func.func @transform_1(%arg0: i32) -> (i32, i32) {
    %c0_i32 = arith.constant 0 : i32
    %c0_i32_0 = arith.constant 0 : i32
    %c0_i32_1 = arith.constant 0 : i32
    return %c0_i32, %c0_i32_0 : i32, i32
  }
  func.func @transform_2(%arg0: i32) -> (i32, i32) {
    %c0_i32 = arith.constant 0 : i32
    %c0_i32_0 = arith.constant 0 : i32
    %c0_i32_1 = arith.constant 0 : i32
    return %c0_i32, %c0_i32_0 : i32, i32
  }
  func.func @transform_3(%arg0: i32) -> (i32, i32) {
    %c0_i32 = arith.constant 0 : i32
    %c0_i32_0 = arith.constant 0 : i32
    %c0_i32_1 = arith.constant 0 : i32
    return %c0_i32, %c0_i32_0 : i32, i32
  }
  func.func @transform_4(%arg0: i32) -> (i32, i32) {
    %c0_i32 = arith.constant 0 : i32
    %c0_i32_0 = arith.constant 0 : i32
    %c0_i32_1 = arith.constant 0 : i32
    return %c0_i32, %c0_i32_0 : i32, i32
  }
  func.func @transform_5(%arg0: i32) -> (i32, i32) {
    %c0_i32 = arith.constant 0 : i32
    %c0_i32_0 = arith.constant 0 : i32
    return %arg0, %c0_i32 : i32, i32
  }
}

</mosaic_0001>

<llo_original>
// kernel: feed_forward.1
$region0: #{feed_forward.1}
  #allocation0 [shape = 'u32[]', space=smem, size = 0x4, offset = 0x4, fixed_abs, tag = 'smem constant byte address 0x4 - core index']
  #allocation1 [shape = 'u32[144,128]{1,0:T(1,128)}', space=vmem, size = 0x12000, scoped, tag = 'internal scratch']
  %s0 = inlined_call_operand.hbm [shape: f32[16,256], index: 0, kind: input, shape index: {}]
  %s1 = inlined_call_operand.hbm [shape: bf16[256,1024], index: 1, kind: input, shape index: {}]
  %s2 = inlined_call_operand.vmem [shape: f32[1,1024], index: 2, kind: input, shape index: {}]
  %s3 = inlined_call_operand.hbm [shape: bf16[1024,256], index: 3, kind: input, shape index: {}]
  %s4 = inlined_call_operand.vmem [shape: f32[1,256], index: 4, kind: input, shape index: {}]
  %s5 = inlined_call_operand.hbm [shape: bf16[16,256], index: 5, kind: output, shape index: {}]
  %s6 = sld [smem:[#allocation0]]
  $region42: #{feed_forward.1} parent=0
    _
  %s8 = ssub.s32 1, %s6
  %s9 = scalar_select 0, %s8, %s6
  $region1: #{feed_forward.1} parent=0
    #allocation2 [shape = 'u8[16384]{0}', space=vmem, size = 0x4000, scoped, tag = 'input window, operand 0, single buffered']
    #allocation3 [shape = 's32[1]{0}', space=sflag, size = 0x4, scoped, tag = 'scoped memory for feed_forward.1']
    #allocation4 [shape = 's32[1]{0}', space=sflag, size = 0x4, scoped, tag = 'scoped memory for feed_forward.1']
    #allocation5 [shape = 'u8[524288]{0}', space=vmem, size = 0x80000, scoped, tag = 'input window, operand 1, single buffered']
    #allocation6 [shape = 's32[1]{0}', space=sflag, size = 0x4, scoped, tag = 'scoped memory for feed_forward.1']
    #allocation7 [shape = 'u8[524288]{0}', space=vmem, size = 0x80000, scoped, tag = 'input window, operand 3, single buffered']
    #allocation8 [shape = 'u8[8192]{0}', space=vmem, size = 0x2000, scoped, tag = 'output window, operand 0, single buffered']
    %10 = vsyncpa [#allocation3], 0
    %11 = vsyncpa [#allocation6], 0
    %12 = vsyncpa [#allocation4], 0
    // Predicated region
    $region2: #{feed_forward.1} parent=1 // pred_check
      _
    $region3: #{feed_forward.1} parent=1 // pred_check_branch
      %14 = sbr.rel (0) target = $region5
    $region4: #{feed_forward.1} parent=1 // pred_region
      %s16 = ssub.s32 512, 512
      %17 = vsyncadd [#allocation3], %s16
      %s18 = sshll.u32 [#allocation2], 4
      %s19 = int_to_ptr.vmem [resolvable:$true] %s18
      %24 = dma.hbm_to_vmem [thread:$0]  %s0, 512, %s19, [#allocation3], 256, 256, 16
    $region5: #{feed_forward.1} parent=1 // pred_fallthru
      _
    // Predicated region
    $region6: #{feed_forward.1} parent=1 // pred_check
      _
    $region7: #{feed_forward.1} parent=1 // pred_check_branch
      %26 = sbr.rel (0) target = $region9
    $region8: #{feed_forward.1} parent=1 // pred_region
      %s28 = ssub.s32 16384, 16384
      %29 = vsyncadd [#allocation6], %s28
      %s30 = sshll.u32 [#allocation5], 4
      %s31 = int_to_ptr.vmem [resolvable:$true] %s30
      %36 = dma.hbm_to_vmem [thread:$0]  %s1, 16384, %s31, [#allocation6], 512, 512, 32
    $region9: #{feed_forward.1} parent=1 // pred_fallthru
      _
    // Predicated region
    $region10: #{feed_forward.1} parent=1 // pred_check
      _
    $region11: #{feed_forward.1} parent=1 // pred_check_branch
      %38 = sbr.rel (0) target = $region13
    $region12: #{feed_forward.1} parent=1 // pred_region
      _
    $region13: #{feed_forward.1} parent=1 // pred_fallthru
      _
    // Predicated region
    $region14: #{feed_forward.1} parent=1 // pred_check
      _
    $region15: #{feed_forward.1} parent=1 // pred_check_branch
      %40 = sbr.rel (0) target = $region17
    $region16: #{feed_forward.1} parent=1 // pred_region
      %s42 = ssub.s32 16384, 16384
      %43 = vsyncadd [#allocation6], %s42
      %s44 = sshll.u32 [#allocation7], 4
      %s45 = int_to_ptr.vmem [resolvable:$true] %s44
      %50 = dma.hbm_to_vmem [thread:$0]  %s3, 16384, %s45, [#allocation6], 128, 128, 8
    $region17: #{feed_forward.1} parent=1 // pred_fallthru
      _
    // Predicated region
    $region18: #{feed_forward.1} parent=1 // pred_check
      _
    $region19: #{feed_forward.1} parent=1 // pred_check_branch
      %52 = sbr.rel (0) target = $region21
    $region20: #{feed_forward.1} parent=1 // pred_region
      _
    $region21: #{feed_forward.1} parent=1 // pred_fallthru
      _
    // Predicated region
    $region22: #{feed_forward.1} parent=1 // pred_check
      _
    $region23: #{feed_forward.1} parent=1 // pred_check_branch
      %54 = sbr.rel (0) target = $region25
    $region24: #{feed_forward.1} parent=1 // pred_region
      %55 = dma.done [#allocation3], 512
    $region25: #{feed_forward.1} parent=1 // pred_fallthru
      _
    // Predicated region
    $region26: #{feed_forward.1} parent=1 // pred_check
      _
    $region27: #{feed_forward.1} parent=1 // pred_check_branch
      %57 = sbr.rel (0) target = $region29
    $region28: #{feed_forward.1} parent=1 // pred_region
      %58 = dma.done [#allocation6], 16384
    $region29: #{feed_forward.1} parent=1 // pred_fallthru
      _
    // Predicated region
    $region30: #{feed_forward.1} parent=1 // pred_check
      _
    $region31: #{feed_forward.1} parent=1 // pred_check_branch
      %60 = sbr.rel (0) target = $region33
    $region32: #{feed_forward.1} parent=1 // pred_region
      %61 = dma.done [#allocation6], 16384
    $region33: #{feed_forward.1} parent=1 // pred_fallthru
      _
    %v62 = vld [vmem:[#allocation2] sm:$0xff]
    %v63 = vld [vmem:[#allocation2 + $0x8] sm:$0xff]
    %v64 = vld [vmem:[#allocation2 + $0x10] sm:$0xff]
    %v65 = vld [vmem:[#allocation2 + $0x18] sm:$0xff]
    %v66 = vpack.c.bf16 %v64, %v62
    %v67 = vpack.c.bf16 %v65, %v63
    %v68 = vld [vmem:[#allocation5] sm:$0xff]
    %v69 = vld [vmem:[#allocation5 + $0x8] sm:$0xff]
    %v70 = vld [vmem:[#allocation5 + $0x20] sm:$0xff]
    %v71 = vld [vmem:[#allocation5 + $0x28] sm:$0xff]
    %v72 = vld [vmem:[#allocation5 + $0x40] sm:$0xff]
    %v73 = vld [vmem:[#allocation5 + $0x48] sm:$0xff]
    %v74 = vld [vmem:[#allocation5 + $0x60] sm:$0xff]
    %v75 = vld [vmem:[#allocation5 + $0x68] sm:$0xff]
    %v76 = vld [vmem:[#allocation5 + $0x80] sm:$0xff]
    %v77 = vld [vmem:[#allocation5 + $0x88] sm:$0xff]
    %v78 = vld [vmem:[#allocation5 + $0xa0] sm:$0xff]
    %v79 = vld [vmem:[#allocation5 + $0xa8] sm:$0xff]
    %v80 = vld [vmem:[#allocation5 + $0xc0] sm:$0xff]
    %v81 = vld [vmem:[#allocation5 + $0xc8] sm:$0xff]
    %v82 = vld [vmem:[#allocation5 + $0xe0] sm:$0xff]
    %v83 = vld [vmem:[#allocation5 + $0xe8] sm:$0xff]
    %v84 = vld [vmem:[#allocation5 + $0x100] sm:$0xff]
    %v85 = vld [vmem:[#allocation5 + $0x108] sm:$0xff]
    %v86 = vld [vmem:[#allocation5 + $0x120] sm:$0xff]
    %v87 = vld [vmem:[#allocation5 + $0x128] sm:$0xff]
    %v88 = vld [vmem:[#allocation5 + $0x140] sm:$0xff]
    %v89 = vld [vmem:[#allocation5 + $0x148] sm:$0xff]
    %v90 = vld [vmem:[#allocation5 + $0x160] sm:$0xff]
    %v91 = vld [vmem:[#allocation5 + $0x168] sm:$0xff]
    %v92 = vld [vmem:[#allocation5 + $0x180] sm:$0xff]
    %v93 = vld [vmem:[#allocation5 + $0x188] sm:$0xff]
    %v94 = vld [vmem:[#allocation5 + $0x1a0] sm:$0xff]
    %v95 = vld [vmem:[#allocation5 + $0x1a8] sm:$0xff]
    %v96 = vld [vmem:[#allocation5 + $0x1c0] sm:$0xff]
    %v97 = vld [vmem:[#allocation5 + $0x1c8] sm:$0xff]
    %v98 = vld [vmem:[#allocation5 + $0x1e0] sm:$0xff]
    %v99 = vld [vmem:[#allocation5 + $0x1e8] sm:$0xff]
    %v100 = vld [vmem:[#allocation5 + $0x200] sm:$0xff]
    %v101 = vld [vmem:[#allocation5 + $0x208] sm:$0xff]
    %v102 = vld [vmem:[#allocation5 + $0x220] sm:$0xff]
    %v103 = vld [vmem:[#allocation5 + $0x228] sm:$0xff]
    %v104 = vld [vmem:[#allocation5 + $0x240] sm:$0xff]
    %v105 = vld [vmem:[#allocation5 + $0x248] sm:$0xff]
    %v106 = vld [vmem:[#allocation5 + $0x260] sm:$0xff]
    %v107 = vld [vmem:[#allocation5 + $0x268] sm:$0xff]
    %v108 = vld [vmem:[#allocation5 + $0x280] sm:$0xff]
    %v109 = vld [vmem:[#allocation5 + $0x288] sm:$0xff]
    %v110 = vld [vmem:[#allocation5 + $0x2a0] sm:$0xff]
    %v111 = vld [vmem:[#allocation5 + $0x2a8] sm:$0xff]
    %v112 = vld [vmem:[#allocation5 + $0x2c0] sm:$0xff]
    %v113 = vld [vmem:[#allocation5 + $0x2c8] sm:$0xff]
    %v114 = vld [vmem:[#allocation5 + $0x2e0] sm:$0xff]
    %v115 = vld [vmem:[#allocation5 + $0x2e8] sm:$0xff]
    %v116 = vld [vmem:[#allocation5 + $0x300] sm:$0xff]
    %v117 = vld [vmem:[#allocation5 + $0x308] sm:$0xff]
    %v118 = vld [vmem:[#allocation5 + $0x320] sm:$0xff]
    %v119 = vld [vmem:[#allocation5 + $0x328] sm:$0xff]
    %v120 = vld [vmem:[#allocation5 + $0x340] sm:$0xff]
    %v121 = vld [vmem:[#allocation5 + $0x348] sm:$0xff]
    %v122 = vld [vmem:[#allocation5 + $0x360] sm:$0xff]
    %v123 = vld [vmem:[#allocation5 + $0x368] sm:$0xff]
    %v124 = vld [vmem:[#allocation5 + $0x380] sm:$0xff]
    %v125 = vld [vmem:[#allocation5 + $0x388] sm:$0xff]
    %v126 = vld [vmem:[#allocation5 + $0x3a0] sm:$0xff]
    %v127 = vld [vmem:[#allocation5 + $0x3a8] sm:$0xff]
    %v128 = vld [vmem:[#allocation5 + $0x3c0] sm:$0xff]
    %v129 = vld [vmem:[#allocation5 + $0x3c8] sm:$0xff]
    %v130 = vld [vmem:[#allocation5 + $0x3e0] sm:$0xff]
    %v131 = vld [vmem:[#allocation5 + $0x3e8] sm:$0xff]
    %v132 = vld [vmem:[%s2] sm:$0xf]
    %v134 = vlaneseq
    %v135 = vshrl.u32 %v134, 7
    %v136 = vsub.s32 0, %v135
    %v137 = vrot.slane %v132, %v136
    %v138 = vlaneseq
    %v139 = vshrl.u32 %v138, 7
    %v140 = vsub.s32 1, %v139
    %v141 = vrot.slane %v132, %v140
    %v142 = vlaneseq
    %v143 = vshrl.u32 %v142, 7
    %v144 = vsub.s32 2, %v143
    %v145 = vrot.slane %v132, %v144
    %v146 = vlaneseq
    %v147 = vshrl.u32 %v146, 7
    %v148 = vsub.s32 3, %v147
    %v149 = vrot.slane %v132, %v148
    %v218 = vunpack.c.l.b16 %v68
    %v219 = vunpack.c.h.b16 %v68
    %v220 = vunpack.c.l.b16 %v69
    %v221 = vunpack.c.h.b16 %v69
    %v222 = vunpack.c.l.b16 %v70
    %v223 = vunpack.c.h.b16 %v70
    %v224 = vunpack.c.l.b16 %v71
    %v225 = vunpack.c.h.b16 %v71
    %v226 = vunpack.c.l.b16 %v72
    %v227 = vunpack.c.h.b16 %v72
    %v228 = vunpack.c.l.b16 %v73
    %v229 = vunpack.c.h.b16 %v73
    %v230 = vunpack.c.l.b16 %v74
    %v231 = vunpack.c.h.b16 %v74
    %v232 = vunpack.c.l.b16 %v75
    %v233 = vunpack.c.h.b16 %v75
    %v234 = vunpack.c.l.b16 %v76
    %v235 = vunpack.c.h.b16 %v76
    %v236 = vunpack.c.l.b16 %v77
    %v237 = vunpack.c.h.b16 %v77
    %v238 = vunpack.c.l.b16 %v78
    %v239 = vunpack.c.h.b16 %v78
    %v240 = vunpack.c.l.b16 %v79
    %v241 = vunpack.c.h.b16 %v79
    %v242 = vunpack.c.l.b16 %v80
    %v243 = vunpack.c.h.b16 %v80
    %v244 = vunpack.c.l.b16 %v81
    %v245 = vunpack.c.h.b16 %v81
    %v246 = vunpack.c.l.b16 %v82
    %v247 = vunpack.c.h.b16 %v82
    %v248 = vunpack.c.l.b16 %v83
    %v249 = vunpack.c.h.b16 %v83
    %v250 = vunpack.c.l.b16 %v84
    %v251 = vunpack.c.h.b16 %v84
    %v252 = vunpack.c.l.b16 %v85
    %v253 = vunpack.c.h.b16 %v85
    %v254 = vunpack.c.l.b16 %v86
    %v255 = vunpack.c.h.b16 %v86
    %v256 = vunpack.c.l.b16 %v87
    %v257 = vunpack.c.h.b16 %v87
    %v258 = vunpack.c.l.b16 %v88
    %v259 = vunpack.c.h.b16 %v88
    %v260 = vunpack.c.l.b16 %v89
    %v261 = vunpack.c.h.b16 %v89
    %v262 = vunpack.c.l.b16 %v90
    %v263 = vunpack.c.h.b16 %v90
    %v264 = vunpack.c.l.b16 %v91
    %v265 = vunpack.c.h.b16 %v91
    %v266 = vunpack.c.l.b16 %v92
    %v267 = vunpack.c.h.b16 %v92
    %v268 = vunpack.c.l.b16 %v93
    %v269 = vunpack.c.h.b16 %v93
    %v270 = vunpack.c.l.b16 %v94
    %v271 = vunpack.c.h.b16 %v94
    %v272 = vunpack.c.l.b16 %v95
    %v273 = vunpack.c.h.b16 %v95
    %v274 = vunpack.c.l.b16 %v96
    %v275 = vunpack.c.h.b16 %v96
    %v276 = vunpack.c.l.b16 %v97
    %v277 = vunpack.c.h.b16 %v97
    %v278 = vunpack.c.l.b16 %v98
    %v279 = vunpack.c.h.b16 %v98
    %v280 = vunpack.c.l.b16 %v99
    %v281 = vunpack.c.h.b16 %v99
    %v282 = vunpack.c.l.b16 %v100
    %v283 = vunpack.c.h.b16 %v100
    %v284 = vunpack.c.l.b16 %v101
    %v285 = vunpack.c.h.b16 %v101
    %v286 = vunpack.c.l.b16 %v102
    %v287 = vunpack.c.h.b16 %v102
    %v288 = vunpack.c.l.b16 %v103
    %v289 = vunpack.c.h.b16 %v103
    %v290 = vunpack.c.l.b16 %v104
    %v291 = vunpack.c.h.b16 %v104
    %v292 = vunpack.c.l.b16 %v105
    %v293 = vunpack.c.h.b16 %v105
    %v294 = vunpack.c.l.b16 %v106
    %v295 = vunpack.c.h.b16 %v106
    %v296 = vunpack.c.l.b16 %v107
    %v297 = vunpack.c.h.b16 %v107
    %v298 = vunpack.c.l.b16 %v108
    %v299 = vunpack.c.h.b16 %v108
    %v300 = vunpack.c.l.b16 %v109
    %v301 = vunpack.c.h.b16 %v109
    %v302 = vunpack.c.l.b16 %v110
    %v303 = vunpack.c.h.b16 %v110
    %v304 = vunpack.c.l.b16 %v111
    %v305 = vunpack.c.h.b16 %v111
    %v306 = vunpack.c.l.b16 %v112
    %v307 = vunpack.c.h.b16 %v112
    %v308 = vunpack.c.l.b16 %v113
    %v309 = vunpack.c.h.b16 %v113
    %v310 = vunpack.c.l.b16 %v114
    %v311 = vunpack.c.h.b16 %v114
    %v312 = vunpack.c.l.b16 %v115
    %v313 = vunpack.c.h.b16 %v115
    %v314 = vunpack.c.l.b16 %v116
    %v315 = vunpack.c.h.b16 %v116
    %v316 = vunpack.c.l.b16 %v117
    %v317 = vunpack.c.h.b16 %v117
    %v318 = vunpack.c.l.b16 %v118
    %v319 = vunpack.c.h.b16 %v118
    %v320 = vunpack.c.l.b16 %v119
    %v321 = vunpack.c.h.b16 %v119
    %v322 = vunpack.c.l.b16 %v120
    %v323 = vunpack.c.h.b16 %v120
    %v324 = vunpack.c.l.b16 %v121
    %v325 = vunpack.c.h.b16 %v121
    %v326 = vunpack.c.l.b16 %v122
    %v327 = vunpack.c.h.b16 %v122
    %v328 = vunpack.c.l.b16 %v123
    %v329 = vunpack.c.h.b16 %v123
    %v330 = vunpack.c.l.b16 %v124
    %v331 = vunpack.c.h.b16 %v124
    %v332 = vunpack.c.l.b16 %v125
    %v333 = vunpack.c.h.b16 %v125
    %v334 = vunpack.c.l.b16 %v126
    %v335 = vunpack.c.h.b16 %v126
    %v336 = vunpack.c.l.b16 %v127
    %v337 = vunpack.c.h.b16 %v127
    %v338 = vunpack.c.l.b16 %v128
    %v339 = vunpack.c.h.b16 %v128
    %v340 = vunpack.c.l.b16 %v129
    %v341 = vunpack.c.h.b16 %v129
    %v342 = vunpack.c.l.b16 %v130
    %v343 = vunpack.c.h.b16 %v130
    %v344 = vunpack.c.l.b16 %v131
    %v345 = vunpack.c.h.b16 %v131
    %v346 = vpack.c.b16 %v222, %v218
    %v347 = vpack.c.b16 %v223, %v219
    %v348 = vpack.c.b16 %v224, %v220
    %v349 = vpack.c.b16 %v225, %v221
    %v350 = vpack.c.b16 %v230, %v226
    %v351 = vpack.c.b16 %v231, %v227
    %v352 = vpack.c.b16 %v232, %v228
    %v353 = vpack.c.b16 %v233, %v229
    %v354 = vpack.c.b16 %v238, %v234
    %v355 = vpack.c.b16 %v239, %v235
    %v356 = vpack.c.b16 %v240, %v236
    %v357 = vpack.c.b16 %v241, %v237
    %v358 = vpack.c.b16 %v246, %v242
    %v359 = vpack.c.b16 %v247, %v243
    %v360 = vpack.c.b16 %v248, %v244
    %v361 = vpack.c.b16 %v249, %v245
    %v362 = vpack.c.b16 %v254, %v250
    %v363 = vpack.c.b16 %v255, %v251
    %v364 = vpack.c.b16 %v256, %v252
    %v365 = vpack.c.b16 %v257, %v253
    %v366 = vpack.c.b16 %v262, %v258
    %v367 = vpack.c.b16 %v263, %v259
    %v368 = vpack.c.b16 %v264, %v260
    %v369 = vpack.c.b16 %v265, %v261
    %v370 = vpack.c.b16 %v270, %v266
    %v371 = vpack.c.b16 %v271, %v267
    %v372 = vpack.c.b16 %v272, %v268
    %v373 = vpack.c.b16 %v273, %v269
    %v374 = vpack.c.b16 %v278, %v274
    %v375 = vpack.c.b16 %v279, %v275
    %v376 = vpack.c.b16 %v280, %v276
    %v377 = vpack.c.b16 %v281, %v277
    %v378 = vpack.c.b16 %v286, %v282
    %v379 = vpack.c.b16 %v287, %v283
    %v380 = vpack.c.b16 %v288, %v284
    %v381 = vpack.c.b16 %v289, %v285
    %v382 = vpack.c.b16 %v294, %v290
    %v383 = vpack.c.b16 %v295, %v291
    %v384 = vpack.c.b16 %v296, %v292
    %v385 = vpack.c.b16 %v297, %v293
    %v386 = vpack.c.b16 %v302, %v298
    %v387 = vpack.c.b16 %v303, %v299
    %v388 = vpack.c.b16 %v304, %v300
    %v389 = vpack.c.b16 %v305, %v301
    %v390 = vpack.c.b16 %v310, %v306
    %v391 = vpack.c.b16 %v311, %v307
    %v392 = vpack.c.b16 %v312, %v308
    %v393 = vpack.c.b16 %v313, %v309
    %v394 = vpack.c.b16 %v318, %v314
    %v395 = vpack.c.b16 %v319, %v315
    %v396 = vpack.c.b16 %v320, %v316
    %v397 = vpack.c.b16 %v321, %v317
    %v398 = vpack.c.b16 %v326, %v322
    %v399 = vpack.c.b16 %v327, %v323
    %v400 = vpack.c.b16 %v328, %v324
    %v401 = vpack.c.b16 %v329, %v325
    %v402 = vpack.c.b16 %v334, %v330
    %v403 = vpack.c.b16 %v335, %v331
    %v404 = vpack.c.b16 %v336, %v332
    %v405 = vpack.c.b16 %v337, %v333
    %v406 = vpack.c.b16 %v342, %v338
    %v407 = vpack.c.b16 %v343, %v339
    %v408 = vpack.c.b16 %v344, %v340
    %v409 = vpack.c.b16 %v345, %v341
    %474 = vmatprep.subr.bf16.mxu0 %v347
    %475 = vmatpush1.bf16.msra.mxu0 %v346
    %476 = vmatprep.subr.bf16.mxu0 %v351
    %477 = vmatpush1.bf16.msra.mxu0 %v350
    %478 = vmatprep.subr.bf16.mxu0 %v355
    %479 = vmatpush1.bf16.msra.mxu0 %v354
    %480 = vmatprep.subr.bf16.mxu0 %v359
    %481 = vmatpush1.bf16.msra.mxu0 %v358
    %482 = vmatprep.subr.bf16.mxu0 %v363
    %483 = vmatpush1.bf16.msra.mxu0 %v362
    %484 = vmatprep.subr.bf16.mxu0 %v367
    %485 = vmatpush1.bf16.msra.mxu0 %v366
    %486 = vmatprep.subr.bf16.mxu0 %v371
    %487 = vmatpush1.bf16.msra.mxu0 %v370
    %488 = vmatprep.subr.bf16.mxu0 %v375
    %489 = vmatpush1.bf16.msra.mxu0 %v374
    %490 = vmatprep.subr.bf16.mxu0 %v379
    %491 = vmatpush1.bf16.msra.mxu0 %v378
    %492 = vmatprep.subr.bf16.mxu0 %v383
    %493 = vmatpush1.bf16.msra.mxu0 %v382
    %494 = vmatprep.subr.bf16.mxu0 %v387
    %495 = vmatpush1.bf16.msra.mxu0 %v386
    %496 = vmatprep.subr.bf16.mxu0 %v391
    %497 = vmatpush1.bf16.msra.mxu0 %v390
    %498 = vmatprep.subr.bf16.mxu0 %v395
    %499 = vmatpush1.bf16.msra.mxu0 %v394
    %500 = vmatprep.subr.bf16.mxu0 %v399
    %501 = vmatpush1.bf16.msra.mxu0 %v398
    %502 = vmatprep.subr.bf16.mxu0 %v403
    %503 = vmatpush1.bf16.msra.mxu0 %v402
    %504 = vmatprep.subr.bf16.mxu0 %v407
    %505 = vmatpush1.bf16.msra.mxu0 %v406
    %506 = vmatprep.mubr.bf16.mxu0 %v67
    %507 = vmatmul.mubr.bf16.gmra.mrb[0].mxu0 %v66
    %v508 = vpop.f32.mrb[0].mxu0
    %v509 = vadd.f32 %v137, %v508
    %v510 = vpop.f32.mrb[0].mxu0
    %v511 = vadd.f32 %v141, %v510
    %v512 = vpop.f32.mrb[0].mxu0
    %v513 = vadd.f32 %v137, %v512
    %v514 = vpop.f32.mrb[0].mxu0
    %v515 = vadd.f32 %v141, %v514
    %516 = vdwg.mxu0
    %517 = vmatprep.subr.bf16.mxu0 %v349
    %518 = vmatpush1.bf16.msra.mxu0 %v348
    %519 = vmatprep.subr.bf16.mxu0 %v353
    %520 = vmatpush1.bf16.msra.mxu0 %v352
    %521 = vmatprep.subr.bf16.mxu0 %v357
    %522 = vmatpush1.bf16.msra.mxu0 %v356
    %523 = vmatprep.subr.bf16.mxu0 %v361
    %524 = vmatpush1.bf16.msra.mxu0 %v360
    %525 = vmatprep.subr.bf16.mxu0 %v365
    %526 = vmatpush1.bf16.msra.mxu0 %v364
    %527 = vmatprep.subr.bf16.mxu0 %v369
    %528 = vmatpush1.bf16.msra.mxu0 %v368
    %529 = vmatprep.subr.bf16.mxu0 %v373
    %530 = vmatpush1.bf16.msra.mxu0 %v372
    %531 = vmatprep.subr.bf16.mxu0 %v377
    %532 = vmatpush1.bf16.msra.mxu0 %v376
    %533 = vmatprep.subr.bf16.mxu0 %v381
    %534 = vmatpush1.bf16.msra.mxu0 %v380
    %535 = vmatprep.subr.bf16.mxu0 %v385
    %536 = vmatpush1.bf16.msra.mxu0 %v384
    %537 = vmatprep.subr.bf16.mxu0 %v389
    %538 = vmatpush1.bf16.msra.mxu0 %v388
    %539 = vmatprep.subr.bf16.mxu0 %v393
    %540 = vmatpush1.bf16.msra.mxu0 %v392
    %541 = vmatprep.subr.bf16.mxu0 %v397
    %542 = vmatpush1.bf16.msra.mxu0 %v396
    %543 = vmatprep.subr.bf16.mxu0 %v401
    %544 = vmatpush1.bf16.msra.mxu0 %v400
    %545 = vmatprep.subr.bf16.mxu0 %v405
    %546 = vmatpush1.bf16.msra.mxu0 %v404
    %547 = vmatprep.subr.bf16.mxu0 %v409
    %548 = vmatpush1.bf16.msra.mxu0 %v408
    %549 = vmatprep.mubr.bf16.mxu0 %v67
    %550 = vmatmul.mubr.bf16.gmra.mrb[0].mxu0 %v66
    %v551 = vpop.f32.mrb[0].mxu0
    %v552 = vadd.f32 %v145, %v551
    %v553 = vpop.f32.mrb[0].mxu0
    %v554 = vadd.f32 %v149, %v553
    %v555 = vpop.f32.mrb[0].mxu0
    %v556 = vadd.f32 %v145, %v555
    %v557 = vpop.f32.mrb[0].mxu0
    %v558 = vadd.f32 %v149, %v557
    %559 = vdwg.mxu0
    %v560 = vmax.f32 %v509, 0.0
    %v561 = vmax.f32 %v511, 0.0
    %v562 = vmax.f32 %v552, 0.0
    %v563 = vmax.f32 %v554, 0.0
    %v564 = vmax.f32 %v513, 0.0
    %v565 = vmax.f32 %v515, 0.0
    %v566 = vmax.f32 %v556, 0.0
    %v567 = vmax.f32 %v558, 0.0
    %v568 = vpack.c.bf16 %v564, %v560
    %v569 = vpack.c.bf16 %v565, %v561
    %v570 = vpack.c.bf16 %v566, %v562
    %v571 = vpack.c.bf16 %v567, %v563
    %v572 = vld [vmem:[#allocation7] sm:$0xff]
    %v573 = vld [vmem:[#allocation7 + $0x8] sm:$0xff]
    %v574 = vld [vmem:[#allocation7 + $0x10] sm:$0xff]
    %v575 = vld [vmem:[#allocation7 + $0x18] sm:$0xff]
    %v576 = vld [vmem:[#allocation7 + $0x20] sm:$0xff]
    %v577 = vld [vmem:[#allocation7 + $0x28] sm:$0xff]
    %v578 = vld [vmem:[#allocation7 + $0x30] sm:$0xff]
    %v579 = vld [vmem:[#allocation7 + $0x38] sm:$0xff]
    %v580 = vld [vmem:[#allocation7 + $0x40] sm:$0xff]
    %v581 = vld [vmem:[#allocation7 + $0x48] sm:$0xff]
    %v582 = vld [vmem:[#allocation7 + $0x50] sm:$0xff]
    %v583 = vld [vmem:[#allocation7 + $0x58] sm:$0xff]
    %v584 = vld [vmem:[#allocation7 + $0x60] sm:$0xff]
    %v585 = vld [vmem:[#allocation7 + $0x68] sm:$0xff]
    %v586 = vld [vmem:[#allocation7 + $0x70] sm:$0xff]
    %v587 = vld [vmem:[#allocation7 + $0x78] sm:$0xff]
    %v588 = vld [vmem:[#allocation7 + $0x80] sm:$0xff]
    %v589 = vld [vmem:[#allocation7 + $0x88] sm:$0xff]
    %v590 = vld [vmem:[#allocation7 + $0x90] sm:$0xff]
    %v591 = vld [vmem:[#allocation7 + $0x98] sm:$0xff]
    %v592 = vld [vmem:[#allocation7 + $0xa0] sm:$0xff]
    %v593 = vld [vmem:[#allocation7 + $0xa8] sm:$0xff]
    %v594 = vld [vmem:[#allocation7 + $0xb0] sm:$0xff]
    %v595 = vld [vmem:[#allocation7 + $0xb8] sm:$0xff]
    %v596 = vld [vmem:[#allocation7 + $0xc0] sm:$0xff]
    %v597 = vld [vmem:[#allocation7 + $0xc8] sm:$0xff]
    %v598 = vld [vmem:[#allocation7 + $0xd0] sm:$0xff]
    %v599 = vld [vmem:[#allocation7 + $0xd8] sm:$0xff]
    %v600 = vld [vmem:[#allocation7 + $0xe0] sm:$0xff]
    %v601 = vld [vmem:[#allocation7 + $0xe8] sm:$0xff]
    %v602 = vld [vmem:[#allocation7 + $0xf0] sm:$0xff]
    %v603 = vld [vmem:[#allocation7 + $0xf8] sm:$0xff]
    %v604 = vld [vmem:[#allocation7 + $0x100] sm:$0xff]
    %v605 = vld [vmem:[#allocation7 + $0x108] sm:$0xff]
    %v606 = vld [vmem:[#allocation7 + $0x110] sm:$0xff]
    %v607 = vld [vmem:[#allocation7 + $0x118] sm:$0xff]
    %v608 = vld [vmem:[#allocation7 + $0x120] sm:$0xff]
    %v609 = vld [vmem:[#allocation7 + $0x128] sm:$0xff]
    %v610 = vld [vmem:[#allocation7 + $0x130] sm:$0xff]
    %v611 = vld [vmem:[#allocation7 + $0x138] sm:$0xff]
    %v612 = vld [vmem:[#allocation7 + $0x140] sm:$0xff]
    %v613 = vld [vmem:[#allocation7 + $0x148] sm:$0xff]
    %v614 = vld [vmem:[#allocation7 + $0x150] sm:$0xff]
    %v615 = vld [vmem:[#allocation7 + $0x158] sm:$0xff]
    %v616 = vld [vmem:[#allocation7 + $0x160] sm:$0xff]
    %v617 = vld [vmem:[#allocation7 + $0x168] sm:$0xff]
    %v618 = vld [vmem:[#allocation7 + $0x170] sm:$0xff]
    %v619 = vld [vmem:[#allocation7 + $0x178] sm:$0xff]
    %v620 = vld [vmem:[#allocation7 + $0x180] sm:$0xff]
    %v621 = vld [vmem:[#allocation7 + $0x188] sm:$0xff]
    %v622 = vld [vmem:[#allocation7 + $0x190] sm:$0xff]
    %v623 = vld [vmem:[#allocation7 + $0x198] sm:$0xff]
    %v624 = vld [vmem:[#allocation7 + $0x1a0] sm:$0xff]
    %v625 = vld [vmem:[#allocation7 + $0x1a8] sm:$0xff]
    %v626 = vld [vmem:[#allocation7 + $0x1b0] sm:$0xff]
    %v627 = vld [vmem:[#allocation7 + $0x1b8] sm:$0xff]
    %v628 = vld [vmem:[#allocation7 + $0x1c0] sm:$0xff]
    %v629 = vld [vmem:[#allocation7 + $0x1c8] sm:$0xff]
    %v630 = vld [vmem:[#allocation7 + $0x1d0] sm:$0xff]
    %v631 = vld [vmem:[#allocation7 + $0x1d8] sm:$0xff]
    %v632 = vld [vmem:[#allocation7 + $0x1e0] sm:$0xff]
    %v633 = vld [vmem:[#allocation7 + $0x1e8] sm:$0xff]
    %v634 = vld [vmem:[#allocation7 + $0x1f0] sm:$0xff]
    %v635 = vld [vmem:[#allocation7 + $0x1f8] sm:$0xff]
    %v636 = vld [vmem:[#allocation5 + $0x10] sm:$0xff]
    %v637 = vld [vmem:[#allocation5 + $0x18] sm:$0xff]
    %v638 = vld [vmem:[#allocation5 + $0x30] sm:$0xff]
    %v639 = vld [vmem:[#allocation5 + $0x38] sm:$0xff]
    %v640 = vld [vmem:[#allocation5 + $0x50] sm:$0xff]
    %v641 = vld [vmem:[#allocation5 + $0x58] sm:$0xff]
    %v642 = vld [vmem:[#allocation5 + $0x70] sm:$0xff]
    %v643 = vld [vmem:[#allocation5 + $0x78] sm:$0xff]
    %v644 = vld [vmem:[#allocation5 + $0x90] sm:$0xff]
    %v645 = vld [vmem:[#allocation5 + $0x98] sm:$0xff]
    %v646 = vld [vmem:[#allocation5 + $0xb0] sm:$0xff]
    %v647 = vld [vmem:[#allocation5 + $0xb8] sm:$0xff]
    %v648 = vld [vmem:[#allocation5 + $0xd0] sm:$0xff]
    %v649 = vld [vmem:[#allocation5 + $0xd8] sm:$0xff]
    %v650 = vld [vmem:[#allocation5 + $0xf0] sm:$0xff]
    %v651 = vld [vmem:[#allocation5 + $0xf8] sm:$0xff]
    %v652 = vld [vmem:[#allocation5 + $0x110] sm:$0xff]
    %v653 = vld [vmem:[#allocation5 + $0x118] sm:$0xff]
    %v654 = vld [vmem:[#allocation5 + $0x130] sm:$0xff]
    %v655 = vld [vmem:[#allocation5 + $0x138] sm:$0xff]
    %v656 = vld [vmem:[#allocation5 + $0x150] sm:$0xff]
    %v657 = vld [vmem:[#allocation5 + $0x158] sm:$0xff]
    %v658 = vld [vmem:[#allocation5 + $0x170] sm:$0xff]
    %v659 = vld [vmem:[#allocation5 + $0x178] sm:$0xff]
    %v660 = vld [vmem:[#allocation5 + $0x190] sm:$0xff]
    %v661 = vld [vmem:[#allocation5 + $0x198] sm:$0xff]
    %v662 = vld [vmem:[#allocation5 + $0x1b0] sm:$0xff]
    %v663 = vld [vmem:[#allocation5 + $0x1b8] sm:$0xff]
    %v664 = vld [vmem:[#allocation5 + $0x1d0] sm:$0xff]
    %v665 = vld [vmem:[#allocation5 + $0x1d8] sm:$0xff]
    %v666 = vld [vmem:[#allocation5 + $0x1f0] sm:$0xff]
    %v667 = vld [vmem:[#allocation5 + $0x1f8] sm:$0xff]
    %v668 = vld [vmem:[#allocation5 + $0x210] sm:$0xff]
    %v669 = vld [vmem:[#allocation5 + $0x218] sm:$0xff]
    %v670 = vld [vmem:[#allocation5 + $0x230] sm:$0xff]
    %v671 = vld [vmem:[#allocation5 + $0x238] sm:$0xff]
    %v672 = vld [vmem:[#allocation5 + $0x250] sm:$0xff]
    %v673 = vld [vmem:[#allocation5 + $0x258] sm:$0xff]
    %v674 = vld [vmem:[#allocation5 + $0x270] sm:$0xff]
    %v675 = vld [vmem:[#allocation5 + $0x278] sm:$0xff]
    %v676 = vld [vmem:[#allocation5 + $0x290] sm:$0xff]
    %v677 = vld [vmem:[#allocation5 + $0x298] sm:$0xff]
    %v678 = vld [vmem:[#allocation5 + $0x2b0] sm:$0xff]
    %v679 = vld [vmem:[#allocation5 + $0x2b8] sm:$0xff]
    %v680 = vld [vmem:[#allocation5 + $0x2d0] sm:$0xff]
    %v681 = vld [vmem:[#allocation5 + $0x2d8] sm:$0xff]
    %v682 = vld [vmem:[#allocation5 + $0x2f0] sm:$0xff]
    %v683 = vld [vmem:[#allocation5 + $0x2f8] sm:$0xff]
    %v684 = vld [vmem:[#allocation5 + $0x310] sm:$0xff]
    %v685 = vld [vmem:[#allocation5 + $0x318] sm:$0xff]
    %v686 = vld [vmem:[#allocation5 + $0x330] sm:$0xff]
    %v687 = vld [vmem:[#allocation5 + $0x338] sm:$0xff]
    %v688 = vld [vmem:[#allocation5 + $0x350] sm:$0xff]
    %v689 = vld [vmem:[#allocation5 + $0x358] sm:$0xff]
    %v690 = vld [vmem:[#allocation5 + $0x370] sm:$0xff]
    %v691 = vld [vmem:[#allocation5 + $0x378] sm:$0xff]
    %v692 = vld [vmem:[#allocation5 + $0x390] sm:$0xff]
    %v693 = vld [vmem:[#allocation5 + $0x398] sm:$0xff]
    %v694 = vld [vmem:[#allocation5 + $0x3b0] sm:$0xff]
    %v695 = vld [vmem:[#allocation5 + $0x3b8] sm:$0xff]
    %v696 = vld [vmem:[#allocation5 + $0x3d0] sm:$0xff]
    %v697 = vld [vmem:[#allocation5 + $0x3d8] sm:$0xff]
    %v698 = vld [vmem:[#allocation5 + $0x3f0] sm:$0xff]
    %v699 = vld [vmem:[#allocation5 + $0x3f8] sm:$0xff]
    %v700 = vld [vmem:[%s2 + $0x4] sm:$0xf]
    %v702 = vlaneseq
    %v703 = vshrl.u32 %v702, 7
    %v704 = vsub.s32 0, %v703
    %v705 = vrot.slane %v700, %v704
    %v706 = vlaneseq
    %v707 = vshrl.u32 %v706, 7
    %v708 = vsub.s32 1, %v707
    %v709 = vrot.slane %v700, %v708
    %v710 = vlaneseq
    %v711 = vshrl.u32 %v710, 7
    %v712 = vsub.s32 2, %v711
    %v713 = vrot.slane %v700, %v712
    %v714 = vlaneseq
    %v715 = vshrl.u32 %v714, 7
    %v716 = vsub.s32 3, %v715
    %v717 = vrot.slane %v700, %v716
    %v786 = vunpack.c.l.b16 %v636
    %v787 = vunpack.c.h.b16 %v636
    %v788 = vunpack.c.l.b16 %v637
    %v789 = vunpack.c.h.b16 %v637
    %v790 = vunpack.c.l.b16 %v638
    %v791 = vunpack.c.h.b16 %v638
    %v792 = vunpack.c.l.b16 %v639
    %v793 = vunpack.c.h.b16 %v639
    %v794 = vunpack.c.l.b16 %v640
    %v795 = vunpack.c.h.b16 %v640
    %v796 = vunpack.c.l.b16 %v641
    %v797 = vunpack.c.h.b16 %v641
    %v798 = vunpack.c.l.b16 %v642
    %v799 = vunpack.c.h.b16 %v642
    %v800 = vunpack.c.l.b16 %v643
    %v801 = vunpack.c.h.b16 %v643
    %v802 = vunpack.c.l.b16 %v644
    %v803 = vunpack.c.h.b16 %v644
    %v804 = vunpack.c.l.b16 %v645
    %v805 = vunpack.c.h.b16 %v645
    %v806 = vunpack.c.l.b16 %v646
    %v807 = vunpack.c.h.b16 %v646
    %v808 = vunpack.c.l.b16 %v647
    %v809 = vunpack.c.h.b16 %v647
    %v810 = vunpack.c.l.b16 %v648
    %v811 = vunpack.c.h.b16 %v648
    %v812 = vunpack.c.l.b16 %v649
    %v813 = vunpack.c.h.b16 %v649
    %v814 = vunpack.c.l.b16 %v650
    %v815 = vunpack.c.h.b16 %v650
    %v816 = vunpack.c.l.b16 %v651
    %v817 = vunpack.c.h.b16 %v651
    %v818 = vunpack.c.l.b16 %v652
    %v819 = vunpack.c.h.b16 %v652
    %v820 = vunpack.c.l.b16 %v653
    %v821 = vunpack.c.h.b16 %v653
    %v822 = vunpack.c.l.b16 %v654
    %v823 = vunpack.c.h.b16 %v654
    %v824 = vunpack.c.l.b16 %v655
    %v825 = vunpack.c.h.b16 %v655
    %v826 = vunpack.c.l.b16 %v656
    %v827 = vunpack.c.h.b16 %v656
    %v828 = vunpack.c.l.b16 %v657
    %v829 = vunpack.c.h.b16 %v657
    %v830 = vunpack.c.l.b16 %v658
    %v831 = vunpack.c.h.b16 %v658
    %v832 = vunpack.c.l.b16 %v659
    %v833 = vunpack.c.h.b16 %v659
    %v834 = vunpack.c.l.b16 %v660
    %v835 = vunpack.c.h.b16 %v660
    %v836 = vunpack.c.l.b16 %v661
    %v837 = vunpack.c.h.b16 %v661
    %v838 = vunpack.c.l.b16 %v662
    %v839 = vunpack.c.h.b16 %v662
    %v840 = vunpack.c.l.b16 %v663
    %v841 = vunpack.c.h.b16 %v663
    %v842 = vunpack.c.l.b16 %v664
    %v843 = vunpack.c.h.b16 %v664
    %v844 = vunpack.c.l.b16 %v665
    %v845 = vunpack.c.h.b16 %v665
    %v846 = vunpack.c.l.b16 %v666
    %v847 = vunpack.c.h.b16 %v666
    %v848 = vunpack.c.l.b16 %v667
    %v849 = vunpack.c.h.b16 %v667
    %v850 = vunpack.c.l.b16 %v668
    %v851 = vunpack.c.h.b16 %v668
    %v852 = vunpack.c.l.b16 %v669
    %v853 = vunpack.c.h.b16 %v669
    %v854 = vunpack.c.l.b16 %v670
    %v855 = vunpack.c.h.b16 %v670
    %v856 = vunpack.c.l.b16 %v671
    %v857 = vunpack.c.h.b16 %v671
    %v858 = vunpack.c.l.b16 %v672
    %v859 = vunpack.c.h.b16 %v672
    %v860 = vunpack.c.l.b16 %v673
    %v861 = vunpack.c.h.b16 %v673
    %v862 = vunpack.c.l.b16 %v674
    %v863 = vunpack.c.h.b16 %v674
    %v864 = vunpack.c.l.b16 %v675
    %v865 = vunpack.c.h.b16 %v675
    %v866 = vunpack.c.l.b16 %v676
    %v867 = vunpack.c.h.b16 %v676
    %v868 = vunpack.c.l.b16 %v677
    %v869 = vunpack.c.h.b16 %v677
    %v870 = vunpack.c.l.b16 %v678
    %v871 = vunpack.c.h.b16 %v678
    %v872 = vunpack.c.l.b16 %v679
    %v873 = vunpack.c.h.b16 %v679
    %v874 = vunpack.c.l.b16 %v680
    %v875 = vunpack.c.h.b16 %v680
    %v876 = vunpack.c.l.b16 %v681
    %v877 = vunpack.c.h.b16 %v681
    %v878 = vunpack.c.l.b16 %v682
    %v879 = vunpack.c.h.b16 %v682
    %v880 = vunpack.c.l.b16 %v683
    %v881 = vunpack.c.h.b16 %v683
    %v882 = vunpack.c.l.b16 %v684
    %v883 = vunpack.c.h.b16 %v684
    %v884 = vunpack.c.l.b16 %v685
    %v885 = vunpack.c.h.b16 %v685
    %v886 = vunpack.c.l.b16 %v686
    %v887 = vunpack.c.h.b16 %v686
    %v888 = vunpack.c.l.b16 %v687
    %v889 = vunpack.c.h.b16 %v687
    %v890 = vunpack.c.l.b16 %v688
    %v891 = vunpack.c.h.b16 %v688
    %v892 = vunpack.c.l.b16 %v689
    %v893 = vunpack.c.h.b16 %v689
    %v894 = vunpack.c.l.b16 %v690
    %v895 = vunpack.c.h.b16 %v690
    %v896 = vunpack.c.l.b16 %v691
    %v897 = vunpack.c.h.b16 %v691
    %v898 = vunpack.c.l.b16 %v692
    %v899 = vunpack.c.h.b16 %v692
    %v900 = vunpack.c.l.b16 %v693
    %v901 = vunpack.c.h.b16 %v693
    %v902 = vunpack.c.l.b16 %v694
    %v903 = vunpack.c.h.b16 %v694
    %v904 = vunpack.c.l.b16 %v695
    %v905 = vunpack.c.h.b16 %v695
    %v906 = vunpack.c.l.b16 %v696
    %v907 = vunpack.c.h.b16 %v696
    %v908 = vunpack.c.l.b16 %v697
    %v909 = vunpack.c.h.b16 %v697
    %v910 = vunpack.c.l.b16 %v698
    %v911 = vunpack.c.h.b16 %v698
    %v912 = vunpack.c.l.b16 %v699
    %v913 = vunpack.c.h.b16 %v699
    %v914 = vpack.c.b16 %v790, %v786
    %v915 = vpack.c.b16 %v791, %v787
    %v916 = vpack.c.b16 %v792, %v788
    %v917 = vpack.c.b16 %v793, %v789
    %v918 = vpack.c.b16 %v798, %v794
    %v919 = vpack.c.b16 %v799, %v795
    %v920 = vpack.c.b16 %v800, %v796
    %v921 = vpack.c.b16 %v801, %v797
    %v922 = vpack.c.b16 %v806, %v802
    %v923 = vpack.c.b16 %v807, %v803
    %v924 = vpack.c.b16 %v808, %v804
    %v925 = vpack.c.b16 %v809, %v805
    %v926 = vpack.c.b16 %v814, %v810
    %v927 = vpack.c.b16 %v815, %v811
    %v928 = vpack.c.b16 %v816, %v812
    %v929 = vpack.c.b16 %v817, %v813
    %v930 = vpack.c.b16 %v822, %v818
    %v931 = vpack.c.b16 %v823, %v819
    %v932 = vpack.c.b16 %v824, %v820
    %v933 = vpack.c.b16 %v825, %v821
    %v934 = vpack.c.b16 %v830, %v826
    %v935 = vpack.c.b16 %v831, %v827
    %v936 = vpack.c.b16 %v832, %v828
    %v937 = vpack.c.b16 %v833, %v829
    %v938 = vpack.c.b16 %v838, %v834
    %v939 = vpack.c.b16 %v839, %v835
    %v940 = vpack.c.b16 %v840, %v836
    %v941 = vpack.c.b16 %v841, %v837
    %v942 = vpack.c.b16 %v846, %v842
    %v943 = vpack.c.b16 %v847, %v843
    %v944 = vpack.c.b16 %v848, %v844
    %v945 = vpack.c.b16 %v849, %v845
    %v946 = vpack.c.b16 %v854, %v850
    %v947 = vpack.c.b16 %v855, %v851
    %v948 = vpack.c.b16 %v856, %v852
    %v949 = vpack.c.b16 %v857, %v853
    %v950 = vpack.c.b16 %v862, %v858
    %v951 = vpack.c.b16 %v863, %v859
    %v952 = vpack.c.b16 %v864, %v860
    %v953 = vpack.c.b16 %v865, %v861
    %v954 = vpack.c.b16 %v870, %v866
    %v955 = vpack.c.b16 %v871, %v867
    %v956 = vpack.c.b16 %v872, %v868
    %v957 = vpack.c.b16 %v873, %v869
    %v958 = vpack.c.b16 %v878, %v874
    %v959 = vpack.c.b16 %v879, %v875
    %v960 = vpack.c.b16 %v880, %v876
    %v961 = vpack.c.b16 %v881, %v877
    %v962 = vpack.c.b16 %v886, %v882
    %v963 = vpack.c.b16 %v887, %v883
    %v964 = vpack.c.b16 %v888, %v884
    %v965 = vpack.c.b16 %v889, %v885
    %v966 = vpack.c.b16 %v894, %v890
    %v967 = vpack.c.b16 %v895, %v891
    %v968 = vpack.c.b16 %v896, %v892
    %v969 = vpack.c.b16 %v897, %v893
    %v970 = vpack.c.b16 %v902, %v898
    %v971 = vpack.c.b16 %v903, %v899
    %v972 = vpack.c.b16 %v904, %v900
    %v973 = vpack.c.b16 %v905, %v901
    %v974 = vpack.c.b16 %v910, %v906
    %v975 = vpack.c.b16 %v911, %v907
    %v976 = vpack.c.b16 %v912, %v908
    %v977 = vpack.c.b16 %v913, %v909
    %1042 = vmatprep.subr.bf16.mxu0 %v915
    %1043 = vmatpush1.bf16.msra.mxu0 %v914
    %1044 = vmatprep.subr.bf16.mxu0 %v919
    %1045 = vmatpush1.bf16.msra.mxu0 %v918
    %1046 = vmatprep.subr.bf16.mxu0 %v923
    %1047 = vmatpush1.bf16.msra.mxu0 %v922
    %1048 = vmatprep.subr.bf16.mxu0 %v927
    %1049 = vmatpush1.bf16.msra.mxu0 %v926
    %1050 = vmatprep.subr.bf16.mxu0 %v931
    %1051 = vmatpush1.bf16.msra.mxu0 %v930
    %1052 = vmatprep.subr.bf16.mxu0 %v935
    %1053 = vmatpush1.bf16.msra.mxu0 %v934
    %1054 = vmatprep.subr.bf16.mxu0 %v939
    %1055 = vmatpush1.bf16.msra.mxu0 %v938
    %1056 = vmatprep.subr.bf16.mxu0 %v943
    %1057 = vmatpush1.bf16.msra.mxu0 %v942
    %1058 = vmatprep.subr.bf16.mxu0 %v947
    %1059 = vmatpush1.bf16.msra.mxu0 %v946
    %1060 = vmatprep.subr.bf16.mxu0 %v951
    %1061 = vmatpush1.bf16.msra.mxu0 %v950
    %1062 = vmatprep.subr.bf16.mxu0 %v955
    %1063 = vmatpush1.bf16.msra.mxu0 %v954
    %1064 = vmatprep.subr.bf16.mxu0 %v959
    %1065 = vmatpush1.bf16.msra.mxu0 %v958
    %1066 = vmatprep.subr.bf16.mxu0 %v963
    %1067 = vmatpush1.bf16.msra.mxu0 %v962
    %1068 = vmatprep.subr.bf16.mxu0 %v967
    %1069 = vmatpush1.bf16.msra.mxu0 %v966
    %1070 = vmatprep.subr.bf16.mxu0 %v971
    %1071 = vmatpush1.bf16.msra.mxu0 %v970
    %1072 = vmatprep.subr.bf16.mxu0 %v975
    %1073 = vmatpush1.bf16.msra.mxu0 %v974
    %1074 = vmatprep.mubr.bf16.mxu0 %v67
    %1075 = vmatmul.mubr.bf16.gmra.mrb[0].mxu0 %v66
    %v1076 = vpop.f32.mrb[0].mxu0
    %v1077 = vadd.f32 %v705, %v1076
    %v1078 = vpop.f32.mrb[0].mxu0
    %v1079 = vadd.f32 %v709, %v1078
    %v1080 = vpop.f32.mrb[0].mxu0
    %v1081 = vadd.f32 %v705, %v1080
    %v1082 = vpop.f32.mrb[0].mxu0
    %v1083 = vadd.f32 %v709, %v1082
    %1084 = vdwg.mxu0
    %1085 = vmatprep.subr.bf16.mxu0 %v917
    %1086 = vmatpush1.bf16.msra.mxu0 %v916
    %1087 = vmatprep.subr.bf16.mxu0 %v921
    %1088 = vmatpush1.bf16.msra.mxu0 %v920
    %1089 = vmatprep.subr.bf16.mxu0 %v925
    %1090 = vmatpush1.bf16.msra.mxu0 %v924
    %1091 = vmatprep.subr.bf16.mxu0 %v929
    %1092 = vmatpush1.bf16.msra.mxu0 %v928
    %1093 = vmatprep.subr.bf16.mxu0 %v933
    %1094 = vmatpush1.bf16.msra.mxu0 %v932
    %1095 = vmatprep.subr.bf16.mxu0 %v937
    %1096 = vmatpush1.bf16.msra.mxu0 %v936
    %1097 = vmatprep.subr.bf16.mxu0 %v941
    %1098 = vmatpush1.bf16.msra.mxu0 %v940
    %1099 = vmatprep.subr.bf16.mxu0 %v945
    %1100 = vmatpush1.bf16.msra.mxu0 %v944
    %1101 = vmatprep.subr.bf16.mxu0 %v949
    %1102 = vmatpush1.bf16.msra.mxu0 %v948
    %1103 = vmatprep.subr.bf16.mxu0 %v953
    %1104 = vmatpush1.bf16.msra.mxu0 %v952
    %1105 = vmatprep.subr.bf16.mxu0 %v957
    %1106 = vmatpush1.bf16.msra.mxu0 %v956
    %1107 = vmatprep.subr.bf16.mxu0 %v961
    %1108 = vmatpush1.bf16.msra.mxu0 %v960
    %1109 = vmatprep.subr.bf16.mxu0 %v965
    %1110 = vmatpush1.bf16.msra.mxu0 %v964
    %1111 = vmatprep.subr.bf16.mxu0 %v969
    %1112 = vmatpush1.bf16.msra.mxu0 %v968
    %1113 = vmatprep.subr.bf16.mxu0 %v973
    %1114 = vmatpush1.bf16.msra.mxu0 %v972
    %1115 = vmatprep.subr.bf16.mxu0 %v977
    %1116 = vmatpush1.bf16.msra.mxu0 %v976
    %1117 = vmatprep.mubr.bf16.mxu0 %v67
    %1118 = vmatmul.mubr.bf16.gmra.mrb[0].mxu0 %v66
    %v1119 = vpop.f32.mrb[0].mxu0
    %v1120 = vadd.f32 %v713, %v1119
    %v1121 = vpop.f32.mrb[0].mxu0
    %v1122 = vadd.f32 %v717, %v1121
    %v1123 = vpop.f32.mrb[0].mxu0
    %v1124 = vadd.f32 %v713, %v1123
    %v1125 = vpop.f32.mrb[0].mxu0
    %v1126 = vadd.f32 %v717, %v1125
    %1127 = vdwg.mxu0
    %v1128 = vmax.f32 %v1077, 0.0
    %v1129 = vmax.f32 %v1079, 0.0
    %v1130 = vmax.f32 %v1120, 0.0
    %v1131 = vmax.f32 %v1122, 0.0
    %v1132 = vmax.f32 %v1081, 0.0
    %v1133 = vmax.f32 %v1083, 0.0
    %v1134 = vmax.f32 %v1124, 0.0
    %v1135 = vmax.f32 %v1126, 0.0
    %v1136 = vpack.c.bf16 %v1132, %v1128
    %v1137 = vpack.c.bf16 %v1133, %v1129
    %v1138 = vpack.c.bf16 %v1134, %v1130
    %v1139 = vpack.c.bf16 %v1135, %v1131
    %v1140 = vld [vmem:[#allocation7 + $0x200] sm:$0xff]
    %v1141 = vld [vmem:[#allocation7 + $0x208] sm:$0xff]
    %v1142 = vld [vmem:[#allocation7 + $0x210] sm:$0xff]
    %v1143 = vld [vmem:[#allocation7 + $0x218] sm:$0xff]
    %v1144 = vld [vmem:[#allocation7 + $0x220] sm:$0xff]
    %v1145 = vld [vmem:[#allocation7 + $0x228] sm:$0xff]
    %v1146 = vld [vmem:[#allocation7 + $0x230] sm:$0xff]
    %v1147 = vld [vmem:[#allocation7 + $0x238] sm:$0xff]
    %v1148 = vld [vmem:[#allocation7 + $0x240] sm:$0xff]
    %v1149 = vld [vmem:[#allocation7 + $0x248] sm:$0xff]
    %v1150 = vld [vmem:[#allocation7 + $0x250] sm:$0xff]
    %v1151 = vld [vmem:[#allocation7 + $0x258] sm:$0xff]
    %v1152 = vld [vmem:[#allocation7 + $0x260] sm:$0xff]
    %v1153 = vld [vmem:[#allocation7 + $0x268] sm:$0xff]
    %v1154 = vld [vmem:[#allocation7 + $0x270] sm:$0xff]
    %v1155 = vld [vmem:[#allocation7 + $0x278] sm:$0xff]
    %v1156 = vld [vmem:[#allocation7 + $0x280] sm:$0xff]
    %v1157 = vld [vmem:[#allocation7 + $0x288] sm:$0xff]
    %v1158 = vld [vmem:[#allocation7 + $0x290] sm:$0xff]
    %v1159 = vld [vmem:[#allocation7 + $0x298] sm:$0xff]
    %v1160 = vld [vmem:[#allocation7 + $0x2a0] sm:$0xff]
    %v1161 = vld [vmem:[#allocation7 + $0x2a8] sm:$0xff]
    %v1162 = vld [vmem:[#allocation7 + $0x2b0] sm:$0xff]
    %v1163 = vld [vmem:[#allocation7 + $0x2b8] sm:$0xff]
    %v1164 = vld [vmem:[#allocation7 + $0x2c0] sm:$0xff]
    %v1165 = vld [vmem:[#allocation7 + $0x2c8] sm:$0xff]
    %v1166 = vld [vmem:[#allocation7 + $0x2d0] sm:$0xff]
    %v1167 = vld [vmem:[#allocation7 + $0x2d8] sm:$0xff]
    %v1168 = vld [vmem:[#allocation7 + $0x2e0] sm:$0xff]
    %v1169 = vld [vmem:[#allocation7 + $0x2e8] sm:$0xff]
    %v1170 = vld [vmem:[#allocation7 + $0x2f0] sm:$0xff]
    %v1171 = vld [vmem:[#allocation7 + $0x2f8] sm:$0xff]
    %v1172 = vld [vmem:[#allocation7 + $0x300] sm:$0xff]
    %v1173 = vld [vmem:[#allocation7 + $0x308] sm:$0xff]
    %v1174 = vld [vmem:[#allocation7 + $0x310] sm:$0xff]
    %v1175 = vld [vmem:[#allocation7 + $0x318] sm:$0xff]
    %v1176 = vld [vmem:[#allocation7 + $0x320] sm:$0xff]
    %v1177 = vld [vmem:[#allocation7 + $0x328] sm:$0xff]
    %v1178 = vld [vmem:[#allocation7 + $0x330] sm:$0xff]
    %v1179 = vld [vmem:[#allocation7 + $0x338] sm:$0xff]
    %v1180 = vld [vmem:[#allocation7 + $0x340] sm:$0xff]
    %v1181 = vld [vmem:[#allocation7 + $0x348] sm:$0xff]
    %v1182 = vld [vmem:[#allocation7 + $0x350] sm:$0xff]
    %v1183 = vld [vmem:[#allocation7 + $0x358] sm:$0xff]
    %v1184 = vld [vmem:[#allocation7 + $0x360] sm:$0xff]
    %v1185 = vld [vmem:[#allocation7 + $0x368] sm:$0xff]
    %v1186 = vld [vmem:[#allocation7 + $0x370] sm:$0xff]
    %v1187 = vld [vmem:[#allocation7 + $0x378] sm:$0xff]
    %v1188 = vld [vmem:[#allocation7 + $0x380] sm:$0xff]
    %v1189 = vld [vmem:[#allocation7 + $0x388] sm:$0xff]
    %v1190 = vld [vmem:[#allocation7 + $0x390] sm:$0xff]
    %v1191 = vld [vmem:[#allocation7 + $0x398] sm:$0xff]
    %v1192 = vld [vmem:[#allocation7 + $0x3a0] sm:$0xff]
    %v1193 = vld [vmem:[#allocation7 + $0x3a8] sm:$0xff]
    %v1194 = vld [vmem:[#allocation7 + $0x3b0] sm:$0xff]
    %v1195 = vld [vmem:[#allocation7 + $0x3b8] sm:$0xff]
    %v1196 = vld [vmem:[#allocation7 + $0x3c0] sm:$0xff]
    %v1197 = vld [vmem:[#allocation7 + $0x3c8] sm:$0xff]
    %v1198 = vld [vmem:[#allocation7 + $0x3d0] sm:$0xff]
    %v1199 = vld [vmem:[#allocation7 + $0x3d8] sm:$0xff]
    %v1200 = vld [vmem:[#allocation7 + $0x3e0] sm:$0xff]
    %v1201 = vld [vmem:[#allocation7 + $0x3e8] sm:$0xff]
    %v1202 = vld [vmem:[#allocation7 + $0x3f0] sm:$0xff]
    %v1203 = vld [vmem:[#allocation7 + $0x3f8] sm:$0xff]
    %v1268 = vunpack.c.l.b16 %v1140
    %v1269 = vunpack.c.h.b16 %v1140
    %v1270 = vunpack.c.l.b16 %v1141
    %v1271 = vunpack.c.h.b16 %v1141
    %v1272 = vunpack.c.l.b16 %v1142
    %v1273 = vunpack.c.h.b16 %v1142
    %v1274 = vunpack.c.l.b16 %v1143
    %v1275 = vunpack.c.h.b16 %v1143
    %v1276 = vunpack.c.l.b16 %v1144
    %v1277 = vunpack.c.h.b16 %v1144
    %v1278 = vunpack.c.l.b16 %v1145
    %v1279 = vunpack.c.h.b16 %v1145
    %v1280 = vunpack.c.l.b16 %v1146
    %v1281 = vunpack.c.h.b16 %v1146
    %v1282 = vunpack.c.l.b16 %v1147
    %v1283 = vunpack.c.h.b16 %v1147
    %v1284 = vunpack.c.l.b16 %v1148
    %v1285 = vunpack.c.h.b16 %v1148
    %v1286 = vunpack.c.l.b16 %v1149
    %v1287 = vunpack.c.h.b16 %v1149
    %v1288 = vunpack.c.l.b16 %v1150
    %v1289 = vunpack.c.h.b16 %v1150
    %v1290 = vunpack.c.l.b16 %v1151
    %v1291 = vunpack.c.h.b16 %v1151
    %v1292 = vunpack.c.l.b16 %v1152
    %v1293 = vunpack.c.h.b16 %v1152
    %v1294 = vunpack.c.l.b16 %v1153
    %v1295 = vunpack.c.h.b16 %v1153
    %v1296 = vunpack.c.l.b16 %v1154
    %v1297 = vunpack.c.h.b16 %v1154
    %v1298 = vunpack.c.l.b16 %v1155
    %v1299 = vunpack.c.h.b16 %v1155
    %v1300 = vunpack.c.l.b16 %v1156
    %v1301 = vunpack.c.h.b16 %v1156
    %v1302 = vunpack.c.l.b16 %v1157
    %v1303 = vunpack.c.h.b16 %v1157
    %v1304 = vunpack.c.l.b16 %v1158
    %v1305 = vunpack.c.h.b16 %v1158
    %v1306 = vunpack.c.l.b16 %v1159
    %v1307 = vunpack.c.h.b16 %v1159
    %v1308 = vunpack.c.l.b16 %v1160
    %v1309 = vunpack.c.h.b16 %v1160
    %v1310 = vunpack.c.l.b16 %v1161
    %v1311 = vunpack.c.h.b16 %v1161
    %v1312 = vunpack.c.l.b16 %v1162
    %v1313 = vunpack.c.h.b16 %v1162
    %v1314 = vunpack.c.l.b16 %v1163
    %v1315 = vunpack.c.h.b16 %v1163
    %v1316 = vunpack.c.l.b16 %v1164
    %v1317 = vunpack.c.h.b16 %v1164
    %v1318 = vunpack.c.l.b16 %v1165
    %v1319 = vunpack.c.h.b16 %v1165
    %v1320 = vunpack.c.l.b16 %v1166
    %v1321 = vunpack.c.h.b16 %v1166
    %v1322 = vunpack.c.l.b16 %v1167
    %v1323 = vunpack.c.h.b16 %v1167
    %v1324 = vunpack.c.l.b16 %v1168
    %v1325 = vunpack.c.h.b16 %v1168
    %v1326 = vunpack.c.l.b16 %v1169
    %v1327 = vunpack.c.h.b16 %v1169
    %v1328 = vunpack.c.l.b16 %v1170
    %v1329 = vunpack.c.h.b16 %v1170
    %v1330 = vunpack.c.l.b16 %v1171
    %v1331 = vunpack.c.h.b16 %v1171
    %v1332 = vunpack.c.l.b16 %v1172
    %v1333 = vunpack.c.h.b16 %v1172
    %v1334 = vunpack.c.l.b16 %v1173
    %v1335 = vunpack.c.h.b16 %v1173
    %v1336 = vunpack.c.l.b16 %v1174
    %v1337 = vunpack.c.h.b16 %v1174
    %v1338 = vunpack.c.l.b16 %v1175
    %v1339 = vunpack.c.h.b16 %v1175
    %v1340 = vunpack.c.l.b16 %v1176
    %v1341 = vunpack.c.h.b16 %v1176
    %v1342 = vunpack.c.l.b16 %v1177
    %v1343 = vunpack.c.h.b16 %v1177
    %v1344 = vunpack.c.l.b16 %v1178
    %v1345 = vunpack.c.h.b16 %v1178
    %v1346 = vunpack.c.l.b16 %v1179
    %v1347 = vunpack.c.h.b16 %v1179
    %v1348 = vunpack.c.l.b16 %v1180
    %v1349 = vunpack.c.h.b16 %v1180
    %v1350 = vunpack.c.l.b16 %v1181
    %v1351 = vunpack.c.h.b16 %v1181
    %v1352 = vunpack.c.l.b16 %v1182
    %v1353 = vunpack.c.h.b16 %v1182
    %v1354 = vunpack.c.l.b16 %v1183
    %v1355 = vunpack.c.h.b16 %v1183
    %v1356 = vunpack.c.l.b16 %v1184
    %v1357 = vunpack.c.h.b16 %v1184
    %v1358 = vunpack.c.l.b16 %v1185
    %v1359 = vunpack.c.h.b16 %v1185
    %v1360 = vunpack.c.l.b16 %v1186
    %v1361 = vunpack.c.h.b16 %v1186
    %v1362 = vunpack.c.l.b16 %v1187
    %v1363 = vunpack.c.h.b16 %v1187
    %v1364 = vunpack.c.l.b16 %v1188
    %v1365 = vunpack.c.h.b16 %v1188
    %v1366 = vunpack.c.l.b16 %v1189
    %v1367 = vunpack.c.h.b16 %v1189
    %v1368 = vunpack.c.l.b16 %v1190
    %v1369 = vunpack.c.h.b16 %v1190
    %v1370 = vunpack.c.l.b16 %v1191
    %v1371 = vunpack.c.h.b16 %v1191
    %v1372 = vunpack.c.l.b16 %v1192
    %v1373 = vunpack.c.h.b16 %v1192
    %v1374 = vunpack.c.l.b16 %v1193
    %v1375 = vunpack.c.h.b16 %v1193
    %v1376 = vunpack.c.l.b16 %v1194
    %v1377 = vunpack.c.h.b16 %v1194
    %v1378 = vunpack.c.l.b16 %v1195
    %v1379 = vunpack.c.h.b16 %v1195
    %v1380 = vunpack.c.l.b16 %v1196
    %v1381 = vunpack.c.h.b16 %v1196
    %v1382 = vunpack.c.l.b16 %v1197
    %v1383 = vunpack.c.h.b16 %v1197
    %v1384 = vunpack.c.l.b16 %v1198
    %v1385 = vunpack.c.h.b16 %v1198
    %v1386 = vunpack.c.l.b16 %v1199
    %v1387 = vunpack.c.h.b16 %v1199
    %v1388 = vunpack.c.l.b16 %v1200
    %v1389 = vunpack.c.h.b16 %v1200
    %v1390 = vunpack.c.l.b16 %v1201
    %v1391 = vunpack.c.h.b16 %v1201
    %v1392 = vunpack.c.l.b16 %v1202
    %v1393 = vunpack.c.h.b16 %v1202
    %v1394 = vunpack.c.l.b16 %v1203
    %v1395 = vunpack.c.h.b16 %v1203
    %v1396 = vpack.c.b16 %v1270, %v1268
    %v1397 = vpack.c.b16 %v1271, %v1269
    %v1398 = vpack.c.b16 %v1274, %v1272
    %v1399 = vpack.c.b16 %v1275, %v1273
    %v1400 = vpack.c.b16 %v1278, %v1276
    %v1401 = vpack.c.b16 %v1279, %v1277
    %v1402 = vpack.c.b16 %v1282, %v1280
    %v1403 = vpack.c.b16 %v1283, %v1281
    %v1404 = vpack.c.b16 %v1286, %v1284
    %v1405 = vpack.c.b16 %v1287, %v1285
    %v1406 = vpack.c.b16 %v1290, %v1288
    %v1407 = vpack.c.b16 %v1291, %v1289
    %v1408 = vpack.c.b16 %v1294, %v1292
    %v1409 = vpack.c.b16 %v1295, %v1293
    %v1410 = vpack.c.b16 %v1298, %v1296
    %v1411 = vpack.c.b16 %v1299, %v1297
    %v1412 = vpack.c.b16 %v1302, %v1300
    %v1413 = vpack.c.b16 %v1303, %v1301
    %v1414 = vpack.c.b16 %v1306, %v1304
    %v1415 = vpack.c.b16 %v1307, %v1305
    %v1416 = vpack.c.b16 %v1310, %v1308
    %v1417 = vpack.c.b16 %v1311, %v1309
    %v1418 = vpack.c.b16 %v1314, %v1312
    %v1419 = vpack.c.b16 %v1315, %v1313
    %v1420 = vpack.c.b16 %v1318, %v1316
    %v1421 = vpack.c.b16 %v1319, %v1317
    %v1422 = vpack.c.b16 %v1322, %v1320
    %v1423 = vpack.c.b16 %v1323, %v1321
    %v1424 = vpack.c.b16 %v1326, %v1324
    %v1425 = vpack.c.b16 %v1327, %v1325
    %v1426 = vpack.c.b16 %v1330, %v1328
    %v1427 = vpack.c.b16 %v1331, %v1329
    %v1428 = vpack.c.b16 %v1334, %v1332
    %v1429 = vpack.c.b16 %v1335, %v1333
    %v1430 = vpack.c.b16 %v1338, %v1336
    %v1431 = vpack.c.b16 %v1339, %v1337
    %v1432 = vpack.c.b16 %v1342, %v1340
    %v1433 = vpack.c.b16 %v1343, %v1341
    %v1434 = vpack.c.b16 %v1346, %v1344
    %v1435 = vpack.c.b16 %v1347, %v1345
    %v1436 = vpack.c.b16 %v1350, %v1348
    %v1437 = vpack.c.b16 %v1351, %v1349
    %v1438 = vpack.c.b16 %v1354, %v1352
    %v1439 = vpack.c.b16 %v1355, %v1353
    %v1440 = vpack.c.b16 %v1358, %v1356
    %v1441 = vpack.c.b16 %v1359, %v1357
    %v1442 = vpack.c.b16 %v1362, %v1360
    %v1443 = vpack.c.b16 %v1363, %v1361
    %v1444 = vpack.c.b16 %v1366, %v1364
    %v1445 = vpack.c.b16 %v1367, %v1365
    %v1446 = vpack.c.b16 %v1370, %v1368
    %v1447 = vpack.c.b16 %v1371, %v1369
    %v1448 = vpack.c.b16 %v1374, %v1372
    %v1449 = vpack.c.b16 %v1375, %v1373
    %v1450 = vpack.c.b16 %v1378, %v1376
    %v1451 = vpack.c.b16 %v1379, %v1377
    %v1452 = vpack.c.b16 %v1382, %v1380
    %v1453 = vpack.c.b16 %v1383, %v1381
    %v1454 = vpack.c.b16 %v1386, %v1384
    %v1455 = vpack.c.b16 %v1387, %v1385
    %v1456 = vpack.c.b16 %v1390, %v1388
    %v1457 = vpack.c.b16 %v1391, %v1389
    %v1458 = vpack.c.b16 %v1394, %v1392
    %v1459 = vpack.c.b16 %v1395, %v1393
    %1524 = vmatprep.subr.bf16.mxu0 %v1397
    %1525 = vmatpush1.bf16.msra.mxu0 %v1396
    %1526 = vmatprep.subr.bf16.mxu0 %v1399
    %1527 = vmatpush1.bf16.msra.mxu0 %v1398
    %1528 = vmatprep.subr.bf16.mxu0 %v1401
    %1529 = vmatpush1.bf16.msra.mxu0 %v1400
    %1530 = vmatprep.subr.bf16.mxu0 %v1403
    %1531 = vmatpush1.bf16.msra.mxu0 %v1402
    %1532 = vmatprep.subr.bf16.mxu0 %v1405
    %1533 = vmatpush1.bf16.msra.mxu0 %v1404
    %1534 = vmatprep.subr.bf16.mxu0 %v1407
    %1535 = vmatpush1.bf16.msra.mxu0 %v1406
    %1536 = vmatprep.subr.bf16.mxu0 %v1409
    %1537 = vmatpush1.bf16.msra.mxu0 %v1408
    %1538 = vmatprep.subr.bf16.mxu0 %v1411
    %1539 = vmatpush1.bf16.msra.mxu0 %v1410
    %1540 = vmatprep.subr.bf16.mxu0 %v1413
    %1541 = vmatpush1.bf16.msra.mxu0 %v1412
    %1542 = vmatprep.subr.bf16.mxu0 %v1415
    %1543 = vmatpush1.bf16.msra.mxu0 %v1414
    %1544 = vmatprep.subr.bf16.mxu0 %v1417
    %1545 = vmatpush1.bf16.msra.mxu0 %v1416
    %1546 = vmatprep.subr.bf16.mxu0 %v1419
    %1547 = vmatpush1.bf16.msra.mxu0 %v1418
    %1548 = vmatprep.subr.bf16.mxu0 %v1421
    %1549 = vmatpush1.bf16.msra.mxu0 %v1420
    %1550 = vmatprep.subr.bf16.mxu0 %v1423
    %1551 = vmatpush1.bf16.msra.mxu0 %v1422
    %1552 = vmatprep.subr.bf16.mxu0 %v1425
    %1553 = vmatpush1.bf16.msra.mxu0 %v1424
    %1554 = vmatprep.subr.bf16.mxu0 %v1427
    %1555 = vmatpush1.bf16.msra.mxu0 %v1426
    %1556 = vmatprep.mubr.bf16.mxu0 %v1137
    %1557 = vmatmul.mubr.bf16.gmra.mrb[0].mxu0 %v1136
    %v1558 = vpop.f32.mrb[0].mxu0
    %v1559 = vadd.f32 0.0, %v1558
    %v1560 = vpop.f32.mrb[0].mxu0
    %v1561 = vadd.f32 0.0, %v1560
    %v1562 = vpop.f32.mrb[0].mxu0
    %v1563 = vadd.f32 0.0, %v1562
    %v1564 = vpop.f32.mrb[0].mxu0
    %v1565 = vadd.f32 0.0, %v1564
    %1566 = vdwg.mxu0
    %1567 = vmatprep.subr.bf16.mxu0 %v1429
    %1568 = vmatpush1.bf16.msra.mxu0 %v1428
    %1569 = vmatprep.subr.bf16.mxu0 %v1431
    %1570 = vmatpush1.bf16.msra.mxu0 %v1430
    %1571 = vmatprep.subr.bf16.mxu0 %v1433
    %1572 = vmatpush1.bf16.msra.mxu0 %v1432
    %1573 = vmatprep.subr.bf16.mxu0 %v1435
    %1574 = vmatpush1.bf16.msra.mxu0 %v1434
    %1575 = vmatprep.subr.bf16.mxu0 %v1437
    %1576 = vmatpush1.bf16.msra.mxu0 %v1436
    %1577 = vmatprep.subr.bf16.mxu0 %v1439
    %1578 = vmatpush1.bf16.msra.mxu0 %v1438
    %1579 = vmatprep.subr.bf16.mxu0 %v1441
    %1580 = vmatpush1.bf16.msra.mxu0 %v1440
    %1581 = vmatprep.subr.bf16.mxu0 %v1443
    %1582 = vmatpush1.bf16.msra.mxu0 %v1442
    %1583 = vmatprep.subr.bf16.mxu0 %v1445
    %1584 = vmatpush1.bf16.msra.mxu0 %v1444
    %1585 = vmatprep.subr.bf16.mxu0 %v1447
    %1586 = vmatpush1.bf16.msra.mxu0 %v1446
    %1587 = vmatprep.subr.bf16.mxu0 %v1449
    %1588 = vmatpush1.bf16.msra.mxu0 %v1448
    %1589 = vmatprep.subr.bf16.mxu0 %v1451
    %1590 = vmatpush1.bf16.msra.mxu0 %v1450
    %1591 = vmatprep.subr.bf16.mxu0 %v1453
    %1592 = vmatpush1.bf16.msra.mxu0 %v1452
    %1593 = vmatprep.subr.bf16.mxu0 %v1455
    %1594 = vmatpush1.bf16.msra.mxu0 %v1454
    %1595 = vmatprep.subr.bf16.mxu0 %v1457
    %1596 = vmatpush1.bf16.msra.mxu0 %v1456
    %1597 = vmatprep.subr.bf16.mxu0 %v1459
    %1598 = vmatpush1.bf16.msra.mxu0 %v1458
    %1599 = vmatprep.mubr.bf16.mxu0 %v1139
    %1600 = vmatmul.mubr.bf16.gmra.mrb[0].mxu0 %v1138
    %v1601 = vpop.f32.mrb[0].mxu0
    %v1602 = vadd.f32 %v1559, %v1601
    %v1603 = vpop.f32.mrb[0].mxu0
    %v1604 = vadd.f32 %v1561, %v1603
    %v1605 = vpop.f32.mrb[0].mxu0
    %v1606 = vadd.f32 %v1563, %v1605
    %v1607 = vpop.f32.mrb[0].mxu0
    %v1608 = vadd.f32 %v1565, %v1607
    %1609 = vdwg.mxu0
    %v1674 = vunpack.c.l.b16 %v572
    %v1675 = vunpack.c.h.b16 %v572
    %v1676 = vunpack.c.l.b16 %v573
    %v1677 = vunpack.c.h.b16 %v573
    %v1678 = vunpack.c.l.b16 %v574
    %v1679 = vunpack.c.h.b16 %v574
    %v1680 = vunpack.c.l.b16 %v575
    %v1681 = vunpack.c.h.b16 %v575
    %v1682 = vunpack.c.l.b16 %v576
    %v1683 = vunpack.c.h.b16 %v576
    %v1684 = vunpack.c.l.b16 %v577
    %v1685 = vunpack.c.h.b16 %v577
    %v1686 = vunpack.c.l.b16 %v578
    %v1687 = vunpack.c.h.b16 %v578
    %v1688 = vunpack.c.l.b16 %v579
    %v1689 = vunpack.c.h.b16 %v579
    %v1690 = vunpack.c.l.b16 %v580
    %v1691 = vunpack.c.h.b16 %v580
    %v1692 = vunpack.c.l.b16 %v581
    %v1693 = vunpack.c.h.b16 %v581
    %v1694 = vunpack.c.l.b16 %v582
    %v1695 = vunpack.c.h.b16 %v582
    %v1696 = vunpack.c.l.b16 %v583
    %v1697 = vunpack.c.h.b16 %v583
    %v1698 = vunpack.c.l.b16 %v584
    %v1699 = vunpack.c.h.b16 %v584
    %v1700 = vunpack.c.l.b16 %v585
    %v1701 = vunpack.c.h.b16 %v585
    %v1702 = vunpack.c.l.b16 %v586
    %v1703 = vunpack.c.h.b16 %v586
    %v1704 = vunpack.c.l.b16 %v587
    %v1705 = vunpack.c.h.b16 %v587
    %v1706 = vunpack.c.l.b16 %v588
    %v1707 = vunpack.c.h.b16 %v588
    %v1708 = vunpack.c.l.b16 %v589
    %v1709 = vunpack.c.h.b16 %v589
    %v1710 = vunpack.c.l.b16 %v590
    %v1711 = vunpack.c.h.b16 %v590
    %v1712 = vunpack.c.l.b16 %v591
    %v1713 = vunpack.c.h.b16 %v591
    %v1714 = vunpack.c.l.b16 %v592
    %v1715 = vunpack.c.h.b16 %v592
    %v1716 = vunpack.c.l.b16 %v593
    %v1717 = vunpack.c.h.b16 %v593
    %v1718 = vunpack.c.l.b16 %v594
    %v1719 = vunpack.c.h.b16 %v594
    %v1720 = vunpack.c.l.b16 %v595
    %v1721 = vunpack.c.h.b16 %v595
    %v1722 = vunpack.c.l.b16 %v596
    %v1723 = vunpack.c.h.b16 %v596
    %v1724 = vunpack.c.l.b16 %v597
    %v1725 = vunpack.c.h.b16 %v597
    %v1726 = vunpack.c.l.b16 %v598
    %v1727 = vunpack.c.h.b16 %v598
    %v1728 = vunpack.c.l.b16 %v599
    %v1729 = vunpack.c.h.b16 %v599
    %v1730 = vunpack.c.l.b16 %v600
    %v1731 = vunpack.c.h.b16 %v600
    %v1732 = vunpack.c.l.b16 %v601
    %v1733 = vunpack.c.h.b16 %v601
    %v1734 = vunpack.c.l.b16 %v602
    %v1735 = vunpack.c.h.b16 %v602
    %v1736 = vunpack.c.l.b16 %v603
    %v1737 = vunpack.c.h.b16 %v603
    %v1738 = vunpack.c.l.b16 %v604
    %v1739 = vunpack.c.h.b16 %v604
    %v1740 = vunpack.c.l.b16 %v605
    %v1741 = vunpack.c.h.b16 %v605
    %v1742 = vunpack.c.l.b16 %v606
    %v1743 = vunpack.c.h.b16 %v606
    %v1744 = vunpack.c.l.b16 %v607
    %v1745 = vunpack.c.h.b16 %v607
    %v1746 = vunpack.c.l.b16 %v608
    %v1747 = vunpack.c.h.b16 %v608
    %v1748 = vunpack.c.l.b16 %v609
    %v1749 = vunpack.c.h.b16 %v609
    %v1750 = vunpack.c.l.b16 %v610
    %v1751 = vunpack.c.h.b16 %v610
    %v1752 = vunpack.c.l.b16 %v611
    %v1753 = vunpack.c.h.b16 %v611
    %v1754 = vunpack.c.l.b16 %v612
    %v1755 = vunpack.c.h.b16 %v612
    %v1756 = vunpack.c.l.b16 %v613
    %v1757 = vunpack.c.h.b16 %v613
    %v1758 = vunpack.c.l.b16 %v614
    %v1759 = vunpack.c.h.b16 %v614
    %v1760 = vunpack.c.l.b16 %v615
    %v1761 = vunpack.c.h.b16 %v615
    %v1762 = vunpack.c.l.b16 %v616
    %v1763 = vunpack.c.h.b16 %v616
    %v1764 = vunpack.c.l.b16 %v617
    %v1765 = vunpack.c.h.b16 %v617
    %v1766 = vunpack.c.l.b16 %v618
    %v1767 = vunpack.c.h.b16 %v618
    %v1768 = vunpack.c.l.b16 %v619
    %v1769 = vunpack.c.h.b16 %v619
    %v1770 = vunpack.c.l.b16 %v620
    %v1771 = vunpack.c.h.b16 %v620
    %v1772 = vunpack.c.l.b16 %v621
    %v1773 = vunpack.c.h.b16 %v621
    %v1774 = vunpack.c.l.b16 %v622
    %v1775 = vunpack.c.h.b16 %v622
    %v1776 = vunpack.c.l.b16 %v623
    %v1777 = vunpack.c.h.b16 %v623
    %v1778 = vunpack.c.l.b16 %v624
    %v1779 = vunpack.c.h.b16 %v624
    %v1780 = vunpack.c.l.b16 %v625
    %v1781 = vunpack.c.h.b16 %v625
    %v1782 = vunpack.c.l.b16 %v626
    %v1783 = vunpack.c.h.b16 %v626
    %v1784 = vunpack.c.l.b16 %v627
    %v1785 = vunpack.c.h.b16 %v627
    %v1786 = vunpack.c.l.b16 %v628
    %v1787 = vunpack.c.h.b16 %v628
    %v1788 = vunpack.c.l.b16 %v629
    %v1789 = vunpack.c.h.b16 %v629
    %v1790 = vunpack.c.l.b16 %v630
    %v1791 = vunpack.c.h.b16 %v630
    %v1792 = vunpack.c.l.b16 %v631
    %v1793 = vunpack.c.h.b16 %v631
    %v1794 = vunpack.c.l.b16 %v632
    %v1795 = vunpack.c.h.b16 %v632
    %v1796 = vunpack.c.l.b16 %v633
    %v1797 = vunpack.c.h.b16 %v633
    %v1798 = vunpack.c.l.b16 %v634
    %v1799 = vunpack.c.h.b16 %v634
    %v1800 = vunpack.c.l.b16 %v635
    %v1801 = vunpack.c.h.b16 %v635
    %v1802 = vpack.c.b16 %v1676, %v1674
    %v1803 = vpack.c.b16 %v1677, %v1675
    %v1804 = vpack.c.b16 %v1680, %v1678
    %v1805 = vpack.c.b16 %v1681, %v1679
    %v1806 = vpack.c.b16 %v1684, %v1682
    %v1807 = vpack.c.b16 %v1685, %v1683
    %v1808 = vpack.c.b16 %v1688, %v1686
    %v1809 = vpack.c.b16 %v1689, %v1687
    %v1810 = vpack.c.b16 %v1692, %v1690
    %v1811 = vpack.c.b16 %v1693, %v1691
    %v1812 = vpack.c.b16 %v1696, %v1694
    %v1813 = vpack.c.b16 %v1697, %v1695
    %v1814 = vpack.c.b16 %v1700, %v1698
    %v1815 = vpack.c.b16 %v1701, %v1699
    %v1816 = vpack.c.b16 %v1704, %v1702
    %v1817 = vpack.c.b16 %v1705, %v1703
    %v1818 = vpack.c.b16 %v1708, %v1706
    %v1819 = vpack.c.b16 %v1709, %v1707
    %v1820 = vpack.c.b16 %v1712, %v1710
    %v1821 = vpack.c.b16 %v1713, %v1711
    %v1822 = vpack.c.b16 %v1716, %v1714
    %v1823 = vpack.c.b16 %v1717, %v1715
    %v1824 = vpack.c.b16 %v1720, %v1718
    %v1825 = vpack.c.b16 %v1721, %v1719
    %v1826 = vpack.c.b16 %v1724, %v1722
    %v1827 = vpack.c.b16 %v1725, %v1723
    %v1828 = vpack.c.b16 %v1728, %v1726
    %v1829 = vpack.c.b16 %v1729, %v1727
    %v1830 = vpack.c.b16 %v1732, %v1730
    %v1831 = vpack.c.b16 %v1733, %v1731
    %v1832 = vpack.c.b16 %v1736, %v1734
    %v1833 = vpack.c.b16 %v1737, %v1735
    %v1834 = vpack.c.b16 %v1740, %v1738
    %v1835 = vpack.c.b16 %v1741, %v1739
    %v1836 = vpack.c.b16 %v1744, %v1742
    %v1837 = vpack.c.b16 %v1745, %v1743
    %v1838 = vpack.c.b16 %v1748, %v1746
    %v1839 = vpack.c.b16 %v1749, %v1747
    %v1840 = vpack.c.b16 %v1752, %v1750
    %v1841 = vpack.c.b16 %v1753, %v1751
    %v1842 = vpack.c.b16 %v1756, %v1754
    %v1843 = vpack.c.b16 %v1757, %v1755
    %v1844 = vpack.c.b16 %v1760, %v1758
    %v1845 = vpack.c.b16 %v1761, %v1759
    %v1846 = vpack.c.b16 %v1764, %v1762
    %v1847 = vpack.c.b16 %v1765, %v1763
    %v1848 = vpack.c.b16 %v1768, %v1766
    %v1849 = vpack.c.b16 %v1769, %v1767
    %v1850 = vpack.c.b16 %v1772, %v1770
    %v1851 = vpack.c.b16 %v1773, %v1771
    %v1852 = vpack.c.b16 %v1776, %v1774
    %v1853 = vpack.c.b16 %v1777, %v1775
    %v1854 = vpack.c.b16 %v1780, %v1778
    %v1855 = vpack.c.b16 %v1781, %v1779
    %v1856 = vpack.c.b16 %v1784, %v1782
    %v1857 = vpack.c.b16 %v1785, %v1783
    %v1858 = vpack.c.b16 %v1788, %v1786
    %v1859 = vpack.c.b16 %v1789, %v1787
    %v1860 = vpack.c.b16 %v1792, %v1790
    %v1861 = vpack.c.b16 %v1793, %v1791
    %v1862 = vpack.c.b16 %v1796, %v1794
    %v1863 = vpack.c.b16 %v1797, %v1795
    %v1864 = vpack.c.b16 %v1800, %v1798
    %v1865 = vpack.c.b16 %v1801, %v1799
    %1930 = vmatprep.subr.bf16.mxu0 %v1803
    %1931 = vmatpush1.bf16.msra.mxu0 %v1802
    %1932 = vmatprep.subr.bf16.mxu0 %v1805
    %1933 = vmatpush1.bf16.msra.mxu0 %v1804
    %1934 = vmatprep.subr.bf16.mxu0 %v1807
    %1935 = vmatpush1.bf16.msra.mxu0 %v1806
    %1936 = vmatprep.subr.bf16.mxu0 %v1809
    %1937 = vmatpush1.bf16.msra.mxu0 %v1808
    %1938 = vmatprep.subr.bf16.mxu0 %v1811
    %1939 = vmatpush1.bf16.msra.mxu0 %v1810
    %1940 = vmatprep.subr.bf16.mxu0 %v1813
    %1941 = vmatpush1.bf16.msra.mxu0 %v1812
    %1942 = vmatprep.subr.bf16.mxu0 %v1815
    %1943 = vmatpush1.bf16.msra.mxu0 %v1814
    %1944 = vmatprep.subr.bf16.mxu0 %v1817
    %1945 = vmatpush1.bf16.msra.mxu0 %v1816
    %1946 = vmatprep.subr.bf16.mxu0 %v1819
    %1947 = vmatpush1.bf16.msra.mxu0 %v1818
    %1948 = vmatprep.subr.bf16.mxu0 %v1821
    %1949 = vmatpush1.bf16.msra.mxu0 %v1820
    %1950 = vmatprep.subr.bf16.mxu0 %v1823
    %1951 = vmatpush1.bf16.msra.mxu0 %v1822
    %1952 = vmatprep.subr.bf16.mxu0 %v1825
    %1953 = vmatpush1.bf16.msra.mxu0 %v1824
    %1954 = vmatprep.subr.bf16.mxu0 %v1827
    %1955 = vmatpush1.bf16.msra.mxu0 %v1826
    %1956 = vmatprep.subr.bf16.mxu0 %v1829
    %1957 = vmatpush1.bf16.msra.mxu0 %v1828
    %1958 = vmatprep.subr.bf16.mxu0 %v1831
    %1959 = vmatpush1.bf16.msra.mxu0 %v1830
    %1960 = vmatprep.subr.bf16.mxu0 %v1833
    %1961 = vmatpush1.bf16.msra.mxu0 %v1832
    %1962 = vmatprep.mubr.bf16.mxu0 %v569
    %1963 = vmatmul.mubr.bf16.gmra.mrb[0].mxu0 %v568
    %v1964 = vpop.f32.mrb[0].mxu0
    %v1965 = vadd.f32 %v1602, %v1964
    %v1966 = vpop.f32.mrb[0].mxu0
    %v1967 = vadd.f32 %v1604, %v1966
    %v1968 = vpop.f32.mrb[0].mxu0
    %v1969 = vadd.f32 %v1606, %v1968
    %v1970 = vpop.f32.mrb[0].mxu0
    %v1971 = vadd.f32 %v1608, %v1970
    %1972 = vdwg.mxu0
    %1973 = vmatprep.subr.bf16.mxu0 %v1835
    %1974 = vmatpush1.bf16.msra.mxu0 %v1834
    %1975 = vmatprep.subr.bf16.mxu0 %v1837
    %1976 = vmatpush1.bf16.msra.mxu0 %v1836
    %1977 = vmatprep.subr.bf16.mxu0 %v1839
    %1978 = vmatpush1.bf16.msra.mxu0 %v1838
    %1979 = vmatprep.subr.bf16.mxu0 %v1841
    %1980 = vmatpush1.bf16.msra.mxu0 %v1840
    %1981 = vmatprep.subr.bf16.mxu0 %v1843
    %1982 = vmatpush1.bf16.msra.mxu0 %v1842
    %1983 = vmatprep.subr.bf16.mxu0 %v1845
    %1984 = vmatpush1.bf16.msra.mxu0 %v1844
    %1985 = vmatprep.subr.bf16.mxu0 %v1847
    %1986 = vmatpush1.bf16.msra.mxu0 %v1846
    %1987 = vmatprep.subr.bf16.mxu0 %v1849
    %1988 = vmatpush1.bf16.msra.mxu0 %v1848
    %1989 = vmatprep.subr.bf16.mxu0 %v1851
    %1990 = vmatpush1.bf16.msra.mxu0 %v1850
    %1991 = vmatprep.subr.bf16.mxu0 %v1853
    %1992 = vmatpush1.bf16.msra.mxu0 %v1852
    %1993 = vmatprep.subr.bf16.mxu0 %v1855
    %1994 = vmatpush1.bf16.msra.mxu0 %v1854
    %1995 = vmatprep.subr.bf16.mxu0 %v1857
    %1996 = vmatpush1.bf16.msra.mxu0 %v1856
    %1997 = vmatprep.subr.bf16.mxu0 %v1859
    %1998 = vmatpush1.bf16.msra.mxu0 %v1858
    %1999 = vmatprep.subr.bf16.mxu0 %v1861
    %2000 = vmatpush1.bf16.msra.mxu0 %v1860
    %2001 = vmatprep.subr.bf16.mxu0 %v1863
    %2002 = vmatpush1.bf16.msra.mxu0 %v1862
    %2003 = vmatprep.subr.bf16.mxu0 %v1865
    %2004 = vmatpush1.bf16.msra.mxu0 %v1864
    %2005 = vmatprep.mubr.bf16.mxu0 %v571
    %2006 = vmatmul.mubr.bf16.gmra.mrb[0].mxu0 %v570
    %v2007 = vpop.f32.mrb[0].mxu0
    %v2008 = vadd.f32 %v1965, %v2007
    %v2009 = vpop.f32.mrb[0].mxu0
    %v2010 = vadd.f32 %v1967, %v2009
    %v2011 = vpop.f32.mrb[0].mxu0
    %v2012 = vadd.f32 %v1969, %v2011
    %v2013 = vpop.f32.mrb[0].mxu0
    %v2014 = vadd.f32 %v1971, %v2013
    %2015 = vdwg.mxu0
    %v2016 = vld [vmem:[%s4] sm:$0x3]
    %v2018 = vlaneseq
    %v2019 = vshrl.u32 %v2018, 7
    %v2020 = vsub.s32 0, %v2019
    %v2021 = vrot.slane %v2016, %v2020
    %v2022 = vlaneseq
    %v2023 = vshrl.u32 %v2022, 7
    %v2024 = vsub.s32 1, %v2023
    %v2025 = vrot.slane %v2016, %v2024
    %v2028 = vadd.f32 %v2008, %v2021
    %v2029 = vadd.f32 %v2010, %v2025
    %v2030 = vadd.f32 %v2012, %v2021
    %v2031 = vadd.f32 %v2014, %v2025
    %v2032 = vpack.c.bf16 %v2030, %v2028
    %v2033 = vpack.c.bf16 %v2031, %v2029
    %v2036 = vunpack.c.l.b16 %v2032
    %v2037 = vunpack.c.l.b16 %v2033
    %v2038 = vunpack.c.h.b16 %v2032
    %v2039 = vunpack.c.h.b16 %v2033
    %v2040 = vpack.c.b16 %v2037, %v2036
    %v2041 = vpack.c.b16 %v2039, %v2038
    %2044 = vst [vmem:[#allocation8] sm:$0xff] %v2040
    %2045 = vst [vmem:[#allocation8 + $0x8] sm:$0xff] %v2041
    // Predicated region
    $region34: #{feed_forward.1} parent=1 // pred_check
      _
    $region35: #{feed_forward.1} parent=1 // pred_check_branch
      %2047 = sbr.rel (0) target = $region37
    $region36: #{feed_forward.1} parent=1 // pred_region
      %s2049 = ssub.s32 256, 256
      %2050 = vsyncadd [#allocation4], %s2049
      %s2051 = sshll.u32 [#allocation8], 4
      %s2052 = int_to_ptr.vmem [resolvable:$true] %s2051
      %2057 = dma.vmem_to_hbm [thread:$0]  %s2052, 256, %s5, [#allocation4], 128, 128, 8
    $region37: #{feed_forward.1} parent=1 // pred_fallthru
      _
    // Predicated region
    $region38: #{feed_forward.1} parent=1 // pred_check
      _
    $region39: #{feed_forward.1} parent=1 // pred_check_branch
      %2059 = sbr.rel (0) target = $region41
    $region40: #{feed_forward.1} parent=1 // pred_region
      %2060 = dma.done [#allocation4], 256
    $region41: #{feed_forward.1} parent=1 // pred_fallthru
      _
    %2061 = vsyncpa [#allocation3], 1
    %2062 = vsyncpa [#allocation6], 1
    %2063 = vsyncpa [#allocation4], 1

</llo_original>
